<compile_context>
chip_gen: v7x
topology: tpu7x:2x2x1
jax: 0.10.0
libtpu: 0.0.40
codegen_flags: <defaults>
</compile_context>

<pallas_src>
import functools

import jax
import jax.numpy as jnp
import numpy as np
from jax import lax
from jax.experimental import pallas as pl
from jax.experimental.pallas import tpu as pltpu

# ----------------------------- module configuration --------------------------
PATCH = 32           # patch_size
HID   = 32           # num_hiddens
CH    = 4            # num_channels
B     = 4            # batch
T     = 4096         # sequence length -> n_patches = 128, N = 512 patches total

H4, H2 = HID // 4, HID // 2
L1  = PATCH - 7 + 1          # 26  after conv1 (k=7)
L1P = L1 // 2                # 13  after pool
L2  = L1P - 5 + 1            # 9   after conv2 (k=5)
L2P = L2 // 2                # 4
L3  = L2P - 3 + 1            # 2   after conv3 (k=3)
L3P = L3 // 2                # 1
OUT_FEATS = L3P * HID        # == out_size of the PyTorch module
EPS = 1e-5

# The layout-preserving (l_out, c_out, TN) reshapes in the kernel rely on every
# channel count being a multiple of the 8-row sublane tile.
assert H4 % 8 == 0 and H2 % 8 == 0 and HID % 8 == 0, "channel counts must be multiples of 8"
assert L3P >= 1, "patch_size too small for the conv/pool chain"


# ------------------------------- Pallas kernel --------------------------------
def _conv_bn_relu_pool(a, wt, t, l_out, c_out):
    """One Conv1d + BN(eval) + ReLU + MaxPool1d(2) stage.

    a  : (L_in*C_in, TN) activations (matmul dtype), row = pos*C_in + ch, lanes = patches.
    wt : (L_out*C_out, L_in*C_in) Toeplitz conv matrix, BN scale folded in.
    t  : (C_out, TN) fused conv-bias + BN shift, already lane-dense.
    ->   (L_pool*C_out, TN) in matmul dtype, element-wise work done in f32.
    """
    tn = a.shape[-1]
    y = jnp.dot(wt, a, preferred_element_type=jnp.float32)   # one MXU pass, f32 acc
    y = y.reshape(l_out, c_out, tn)                           # layout-preserving (c_out % 8 == 0)
    y = jnp.maximum(y + t[None, :, :], 0.0)                   # bias + BN shift, ReLU (f32 VPU)
    l_pool = l_out // 2
    y = y[:2 * l_pool].reshape(l_pool, 2, c_out, tn)          # pair positions (untiled dims only)
    y = jnp.maximum(y[:, 0], y[:, 1])                         # MaxPool1d(kernel_size=2)
    return y.reshape(l_pool * c_out, tn).astype(wt.dtype)     # no-op cast on the f32 path


def patch_embed_kernel(x_ref, w1_ref, w2_ref, w3_ref, wl_ref, sh_ref, o_ref):
    sh = sh_ref[...]                                          # (88, TN) f32, resident slab
    t1 = sh[0:H4]
    t2 = sh[H4:H4 + H2]
    t3 = sh[H4 + H2:H4 + H2 + HID]
    bl = sh[H4 + H2 + HID:H4 + H2 + 2 * HID]

    a = x_ref[...]                                            # (PATCH*CH, TN), already matmul dtype
    a = _conv_bn_relu_pool(a, w1_ref[...], t1, L1, H4)        # (L1P*H4,  TN)
    a = _conv_bn_relu_pool(a, w2_ref[...], t2, L2, H2)        # (L2P*H2,  TN)
    a = _conv_bn_relu_pool(a, w3_ref[...], t3, L3, HID)       # (L3P*HID, TN)

    out = jnp.dot(wl_ref[...], a, preferred_element_type=jnp.float32) + bl
    o_ref[...] = out.astype(o_ref.dtype)                      # (HID, TN) lane-dense store


# --------------------------- host-side (setup-time) math -----------------------
def _conv_toeplitz_np(w, scale, l_in):
    """PyTorch Conv1d weight (C_out, C_in, K) -> (L_out*C_out, L_in*C_in) matrix with
    row = l*C_out + o, col = m*C_in + c, entry w[o, c, m-l] * scale[o] (valid conv)."""
    c_out, c_in, k = w.shape
    l_out = l_in - k + 1
    ws = np.transpose(w * scale[:, None, None], (0, 2, 1))    # (C_out, K, C_in)
    wt = np.zeros((l_out, c_out, l_in, c_in), np.float32)
    for l in range(l_out):
        wt[l, :, l:l + k, :] = ws
    return wt.reshape(l_out * c_out, l_in * c_in)


def _fold_bn_np(gamma, beta, mean, var, conv_bias):
    scale = gamma / np.sqrt(var + EPS)
    shift = beta + (conv_bias - mean) * scale
    return scale, shift


def _chip_config():
    """(tensorcores_per_chip, use_bf16_matmul_operands). Conservative fallbacks."""
    kind = ""
    try:
        kind = jax.devices()[0].device_kind.lower()
    except Exception:
        pass
    n_cores = 2 if any(v in kind for v in ("v7", "v5p", "v4")) else 1
    use_bf16 = any(v in kind for v in ("v6", "v7"))           # keep f32 on v5e/older
    return n_cores, use_bf16


# ------------------------------- forward builder --------------------------------
def make_conv_patch_embedding(params, *, batch, seq_len):
    """Precomputes all folded constants once (numpy) and returns (jitted forward, tol)."""
    n_cores, use_bf16 = _chip_config()
    mm_dtype = jnp.bfloat16 if use_bf16 else jnp.float32

    n_patches = seq_len // PATCH
    n = batch * n_patches
    # One grid step per TensorCore (lane width a multiple of 128), capped for generality.
    tn = min(1024, pl.cdiv(pl.cdiv(n, n_cores), 128) * 128)
    n_tiles = pl.cdiv(n, tn)
    n_pad = n_tiles * tn

    p = {k: np.asarray(v, np.float32) for k, v in params.items()}

    # Fold eval-mode BN into the conv weights (scale) and a per-channel shift.
    s1, t1 = _fold_bn_np(p['g1'], p['be1'], p['m1'], p['v1'], p['b1'])
    s2, t2 = _fold_bn_np(p['g2'], p['be2'], p['m2'], p['v2'], p['b2'])
    s3, t3 = _fold_bn_np(p['g3'], p['be3'], p['m3'], p['v3'], p['b3'])
    w1t = _conv_toeplitz_np(p['w1'], s1, PATCH)   # (L1*H4,  PATCH*CH) = (208, 128)
    w2t = _conv_toeplitz_np(p['w2'], s2, L1P)     # (L2*H2,  L1P*H4)   = (144, 104)
    w3t = _conv_toeplitz_np(p['w3'], s3, L2P)     # (L3*HID, L2P*H2)   = (64, 64)
    # linear: PyTorch flatten order is (c, l) = c*L3P + l; kernel rows are (l, c).
    wlp = p['wl'].reshape(HID, HID, L3P).transpose(0, 2, 1).reshape(HID, L3P * HID)
    # Packed shifts / biases, pre-broadcast to a lane-dense (88, TN) slab.
    shifts = np.concatenate([t1, t2, t3, p['bl']]).astype(np.float32)      # (88,)
    sh_slab = np.repeat(shifts[:, None], tn, axis=1)                       # (88, TN)

    # Resident device constants (wrapper-side casts: no per-step cast work in-kernel).
    w1t_d = jnp.asarray(w1t, mm_dtype)
    w2t_d = jnp.asarray(w2t, mm_dtype)
    w3t_d = jnp.asarray(w3t, mm_dtype)
    wlp_d = jnp.asarray(wlp, mm_dtype)
    sh_d  = jnp.asarray(sh_slab, jnp.float32)

    const = lambda a: pl.BlockSpec(a.shape, lambda i: (0, 0))
    patch_embed = pl.pallas_call(
        patch_embed_kernel,
        out_shape=jax.ShapeDtypeStruct((HID, n_pad), jnp.float32),
        grid=(n_tiles,),
        in_specs=[
            pl.BlockSpec((PATCH * CH, tn), lambda i: (0, i)),   # (128, TN) patch block
            const(w1t_d), const(w2t_d), const(w3t_d), const(wlp_d), const(sh_d),
        ],
        out_specs=pl.BlockSpec((HID, tn), lambda i: (0, i)),    # unmasked lane-dense stores
        compiler_params=pltpu.CompilerParams(dimension_semantics=("parallel",)),
    )

    @jax.jit
    def forward(x):
        """x: (B, C, T) in PyTorch NCL layout. Returns (B, n_patches, HID)."""
        b, c, t = x.shape
        assert b == batch and c == CH and t == seq_len
        # x.unfold(2, P, P).transpose(1, 2).reshape(-1, C, P): patch index = b*n_patches + p.
        # Put patches on lanes, (position, channel) interleaved on rows: row = l*CH + c.
        xp = x[:, :, :n_patches * PATCH].reshape(b, c, n_patches, PATCH)   # [b, c, p, l]
        xk = xp.transpose(3, 1, 0, 2).reshape(PATCH * c, n)                # [l*CH + c, b*np + p]
        if n_pad != n:
            xk = jnp.pad(xk, ((0, 0), (0, n_pad - n)))
        xk = xk.astype(mm_dtype)
        out = patch_embed(xk, w1t_d, w2t_d, w3t_d, wlp_d, sh_d)            # (HID, n_pad)
        return out[:, :n].T.reshape(b, n_patches, HID)

    tol = 2e-2 if use_bf16 else 1e-3
    return forward, tol


# --------------------------- pure-JAX reference (check) ------------------------
def ref_forward(x, p):
    b, c, t = x.shape
    n_patches = t // PATCH
    xp = x[:, :, :n_patches * PATCH].reshape(b, c, n_patches, PATCH)
    xp = xp.transpose(0, 2, 1, 3).reshape(b * n_patches, c, PATCH)

    def conv1d(z, w, bias):
        y = lax.conv_general_dilated(z, w, window_strides=(1,), padding='VALID',
                                     dimension_numbers=('NCH', 'OIH', 'NCH'))
        return y + bias[None, :, None]

    def bn(z, g, be, m, v):
        return (z - m[None, :, None]) / jnp.sqrt(v[None, :, None] + EPS) * g[None, :, None] + be[None, :, None]

    def pool(z):
        lp = z.shape[2] // 2
        return z[:, :, :2 * lp].reshape(z.shape[0], z.shape[1], lp, 2).max(-1)

    y = pool(jax.nn.relu(bn(conv1d(xp, p['w1'], p['b1']), p['g1'], p['be1'], p['m1'], p['v1'])))
    y = pool(jax.nn.relu(bn(conv1d(y, p['w2'], p['b2']), p['g2'], p['be2'], p['m2'], p['v2'])))
    y = pool(jax.nn.relu(bn(conv1d(y, p['w3'], p['b3']), p['g3'], p['be3'], p['m3'], p['v3'])))
    flat = y.reshape(y.shape[0], -1)
    out = flat @ p['wl'].T + p['bl']
    return out.reshape(b, n_patches, HID)


# ---------------------------------- params -------------------------------------
def init_params(key):
    ks = jax.random.split(key, 16)

    def conv_init(k, cout, cin, ksz):
        bound = 1.0 / np.sqrt(cin * ksz)
        kw, kb = jax.random.split(k)
        w = jax.random.uniform(kw, (cout, cin, ksz), jnp.float32, -bound, bound)
        b = jax.random.uniform(kb, (cout,), jnp.float32, -bound, bound)
        return w, b

    def bn_init(k, c):
        k1, k2, k3, k4 = jax.random.split(k, 4)
        return dict(g=jax.random.uniform(k1, (c,), jnp.float32, 0.5, 1.5),
                    be=0.1 * jax.random.normal(k2, (c,), jnp.float32),
                    m=0.1 * jax.random.normal(k3, (c,), jnp.float32),
                    v=jax.random.uniform(k4, (c,), jnp.float32, 0.5, 1.5))

    w1, b1 = conv_init(ks[0], H4, CH, 7)
    w2, b2 = conv_init(ks[1], H2, H4, 5)
    w3, b3 = conv_init(ks[2], HID, H2, 3)
    bn1, bn2, bn3 = bn_init(ks[3], H4), bn_init(ks[4], H2), bn_init(ks[5], HID)
    lb = 1.0 / np.sqrt(OUT_FEATS)
    wl = jax.random.uniform(ks[6], (HID, OUT_FEATS), jnp.float32, -lb, lb)
    bl = jax.random.uniform(ks[7], (HID,), jnp.float32, -lb, lb)
    return dict(w1=w1, b1=b1, w2=w2, b2=b2, w3=w3, b3=b3,
                g1=bn1['g'], be1=bn1['be'], m1=bn1['m'], v1=bn1['v'],
                g2=bn2['g'], be2=bn2['be'], m2=bn2['m'], v2=bn2['v'],
                g3=bn3['g'], be3=bn3['be'], m3=bn3['m'], v3=bn3['v'],
                wl=wl, bl=bl)


if __name__ == "__main__":
    key = jax.random.PRNGKey(0)
    kx, kp = jax.random.split(key)
    x = jax.random.normal(kx, (B, CH, T), jnp.float32)
    params = init_params(kp)

    # Setup (Toeplitz folding, constant upload, pallas_call construction) happens ONCE here.
    forward, tol = make_conv_patch_embedding(params, batch=B, seq_len=T)

    out = jax.block_until_ready(forward(x))
    out = jax.block_until_ready(forward(x))   # second call reuses the compiled executable

    ref = jax.block_until_ready(ref_forward(x, params))
    np.testing.assert_allclose(np.asarray(out), np.asarray(ref), rtol=tol, atol=tol)

    print("KERNEL_OK")
</pallas_src>

<mosaic_0001>
module attributes {stable_mosaic.version = 11 : i64} {
  func.func @patch_embed_kernel(%arg0: i32, %arg1: memref<128x512xf32, #tpu.memory_space<vmem>>, %arg2: memref<208x128xf32, #tpu.memory_space<vmem>>, %arg3: memref<144x104xf32, #tpu.memory_space<vmem>>, %arg4: memref<64x64xf32, #tpu.memory_space<vmem>>, %arg5: memref<32x32xf32, #tpu.memory_space<vmem>>, %arg6: memref<88x512xf32, #tpu.memory_space<vmem>>, %arg7: memref<32x512xf32, #tpu.memory_space<vmem>>) attributes {dimension_semantics = [#tpu.dimension_semantics<parallel>], iteration_bounds = array<i64: 1>, scalar_prefetch = 0 : i64, scratch_operands = 0 : i64, tpu.core_type = #tpu.core_type<tc>, window_params = [{transform_indices = @transform_0, window_bounds = array<i64: 128, 512>}, {pipeline_mode = #tpu.pipeline_mode<synchronous>, transform_indices = @transform_1, window_bounds = array<i64: 208, 128>}, {pipeline_mode = #tpu.pipeline_mode<synchronous>, transform_indices = @transform_2, window_bounds = array<i64: 144, 104>}, {pipeline_mode = #tpu.pipeline_mode<synchronous>, transform_indices = @transform_3, window_bounds = array<i64: 64, 64>}, {pipeline_mode = #tpu.pipeline_mode<synchronous>, transform_indices = @transform_4, window_bounds = array<i64: 32, 32>}, {pipeline_mode = #tpu.pipeline_mode<synchronous>, transform_indices = @transform_5, window_bounds = array<i64: 88, 512>}, {transform_indices = @transform_6, window_bounds = array<i64: 32, 512>}]} {
    %c0 = arith.constant 0 : index
    %c0_0 = arith.constant 0 : index
    %0 = vector.load %arg6[%c0, %c0_0] : memref<88x512xf32, #tpu.memory_space<vmem>>, vector<88x512xf32>
    %1 = vector.extract_strided_slice %0 {offsets = [0, 0], sizes = [8, 512], strides = [1, 1]} : vector<88x512xf32> to vector<8x512xf32>
    %2 = vector.extract_strided_slice %0 {offsets = [8, 0], sizes = [16, 512], strides = [1, 1]} : vector<88x512xf32> to vector<16x512xf32>
    %3 = vector.extract_strided_slice %0 {offsets = [24, 0], sizes = [32, 512], strides = [1, 1]} : vector<88x512xf32> to vector<32x512xf32>
    %4 = vector.extract_strided_slice %0 {offsets = [56, 0], sizes = [32, 512], strides = [1, 1]} : vector<88x512xf32> to vector<32x512xf32>
    %c0_1 = arith.constant 0 : index
    %c0_2 = arith.constant 0 : index
    %5 = vector.load %arg1[%c0_1, %c0_2] : memref<128x512xf32, #tpu.memory_space<vmem>>, vector<128x512xf32>
    %c0_3 = arith.constant 0 : index
    %c0_4 = arith.constant 0 : index
    %6 = vector.load %arg2[%c0_3, %c0_4] : memref<208x128xf32, #tpu.memory_space<vmem>>, vector<208x128xf32>
    %cst = arith.constant dense<0.000000e+00> : vector<208x512xf32>
    %7 = tpu.matmul %6, %5, %cst {dimension_numbers = #tpu.dot_dimension_numbers<[1], [0], [0], [1], [0, 0, 1, 1], [], []>} : vector<208x128xf32>, vector<128x512xf32>, vector<208x512xf32> -> vector<208x512xf32>
    %8 = vector.shape_cast %7 : vector<208x512xf32> to vector<26x8x512xf32>
    %9 = vector.shape_cast %1 : vector<8x512xf32> to vector<1x8x512xf32>
    %10 = vector.broadcast %9 : vector<1x8x512xf32> to vector<26x8x512xf32>
    %11 = arith.addf %8, %10 : vector<26x8x512xf32>
    %cst_5 = arith.constant 0.000000e+00 : f32
    %12 = vector.broadcast %cst_5 : f32 to vector<26x8x512xf32>
    %13 = arith.maximumf %11, %12 : vector<26x8x512xf32>
    %14 = vector.shape_cast %13 : vector<26x8x512xf32> to vector<13x2x8x512xf32>
    %15 = vector.extract_strided_slice %14 {offsets = [0, 0, 0, 0], sizes = [13, 1, 8, 512], strides = [1, 1, 1, 1]} : vector<13x2x8x512xf32> to vector<13x1x8x512xf32>
    %16 = vector.shape_cast %15 : vector<13x1x8x512xf32> to vector<13x8x512xf32>
    %17 = vector.extract_strided_slice %14 {offsets = [0, 1, 0, 0], sizes = [13, 1, 8, 512], strides = [1, 1, 1, 1]} : vector<13x2x8x512xf32> to vector<13x1x8x512xf32>
    %18 = vector.shape_cast %17 : vector<13x1x8x512xf32> to vector<13x8x512xf32>
    %19 = arith.maximumf %16, %18 : vector<13x8x512xf32>
    %20 = vector.shape_cast %19 : vector<13x8x512xf32> to vector<104x512xf32>
    %c0_6 = arith.constant 0 : index
    %c0_7 = arith.constant 0 : index
    %21 = vector.load %arg3[%c0_6, %c0_7] : memref<144x104xf32, #tpu.memory_space<vmem>>, vector<144x104xf32>
    %cst_8 = arith.constant dense<0.000000e+00> : vector<144x512xf32>
    %22 = tpu.matmul %21, %20, %cst_8 {dimension_numbers = #tpu.dot_dimension_numbers<[1], [0], [0], [1], [0, 0, 1, 1], [], []>} : vector<144x104xf32>, vector<104x512xf32>, vector<144x512xf32> -> vector<144x512xf32>
    %23 = vector.shape_cast %22 : vector<144x512xf32> to vector<9x16x512xf32>
    %24 = vector.shape_cast %2 : vector<16x512xf32> to vector<1x16x512xf32>
    %25 = vector.broadcast %24 : vector<1x16x512xf32> to vector<9x16x512xf32>
    %26 = arith.addf %23, %25 : vector<9x16x512xf32>
    %cst_9 = arith.constant 0.000000e+00 : f32
    %27 = vector.broadcast %cst_9 : f32 to vector<9x16x512xf32>
    %28 = arith.maximumf %26, %27 : vector<9x16x512xf32>
    %29 = vector.extract_strided_slice %28 {offsets = [0, 0, 0], sizes = [8, 16, 512], strides = [1, 1, 1]} : vector<9x16x512xf32> to vector<8x16x512xf32>
    %30 = vector.shape_cast %29 : vector<8x16x512xf32> to vector<4x2x16x512xf32>
    %31 = vector.extract_strided_slice %30 {offsets = [0, 0, 0, 0], sizes = [4, 1, 16, 512], strides = [1, 1, 1, 1]} : vector<4x2x16x512xf32> to vector<4x1x16x512xf32>
    %32 = vector.shape_cast %31 : vector<4x1x16x512xf32> to vector<4x16x512xf32>
    %33 = vector.extract_strided_slice %30 {offsets = [0, 1, 0, 0], sizes = [4, 1, 16, 512], strides = [1, 1, 1, 1]} : vector<4x2x16x512xf32> to vector<4x1x16x512xf32>
    %34 = vector.shape_cast %33 : vector<4x1x16x512xf32> to vector<4x16x512xf32>
    %35 = arith.maximumf %32, %34 : vector<4x16x512xf32>
    %36 = vector.shape_cast %35 : vector<4x16x512xf32> to vector<64x512xf32>
    %c0_10 = arith.constant 0 : index
    %c0_11 = arith.constant 0 : index
    %37 = vector.load %arg4[%c0_10, %c0_11] : memref<64x64xf32, #tpu.memory_space<vmem>>, vector<64x64xf32>
    %cst_12 = arith.constant dense<0.000000e+00> : vector<64x512xf32>
    %38 = tpu.matmul %37, %36, %cst_12 {dimension_numbers = #tpu.dot_dimension_numbers<[1], [0], [0], [1], [0, 0, 1, 1], [], []>} : vector<64x64xf32>, vector<64x512xf32>, vector<64x512xf32> -> vector<64x512xf32>
    %39 = vector.shape_cast %38 : vector<64x512xf32> to vector<2x32x512xf32>
    %40 = vector.shape_cast %3 : vector<32x512xf32> to vector<1x32x512xf32>
    %41 = vector.broadcast %40 : vector<1x32x512xf32> to vector<2x32x512xf32>
    %42 = arith.addf %39, %41 : vector<2x32x512xf32>
    %cst_13 = arith.constant 0.000000e+00 : f32
    %43 = vector.broadcast %cst_13 : f32 to vector<2x32x512xf32>
    %44 = arith.maximumf %42, %43 : vector<2x32x512xf32>
    %45 = vector.shape_cast %44 : vector<2x32x512xf32> to vector<1x2x32x512xf32>
    %46 = vector.extract_strided_slice %45 {offsets = [0, 0, 0, 0], sizes = [1, 1, 32, 512], strides = [1, 1, 1, 1]} : vector<1x2x32x512xf32> to vector<1x1x32x512xf32>
    %47 = vector.shape_cast %46 : vector<1x1x32x512xf32> to vector<1x32x512xf32>
    %48 = vector.extract_strided_slice %45 {offsets = [0, 1, 0, 0], sizes = [1, 1, 32, 512], strides = [1, 1, 1, 1]} : vector<1x2x32x512xf32> to vector<1x1x32x512xf32>
    %49 = vector.shape_cast %48 : vector<1x1x32x512xf32> to vector<1x32x512xf32>
    %50 = arith.maximumf %47, %49 : vector<1x32x512xf32>
    %51 = vector.shape_cast %50 : vector<1x32x512xf32> to vector<32x512xf32>
    %c0_14 = arith.constant 0 : index
    %c0_15 = arith.constant 0 : index
    %52 = vector.load %arg5[%c0_14, %c0_15] : memref<32x32xf32, #tpu.memory_space<vmem>>, vector<32x32xf32>
    %cst_16 = arith.constant dense<0.000000e+00> : vector<32x512xf32>
    %53 = tpu.matmul %52, %51, %cst_16 {dimension_numbers = #tpu.dot_dimension_numbers<[1], [0], [0], [1], [0, 0, 1, 1], [], []>} : vector<32x32xf32>, vector<32x512xf32>, vector<32x512xf32> -> vector<32x512xf32>
    %54 = arith.addf %53, %4 : vector<32x512xf32>
    %c0_17 = arith.constant 0 : index
    %c0_18 = arith.constant 0 : index
    %55 = vector.load %arg7[%c0_17, %c0_18] : memref<32x512xf32, #tpu.memory_space<vmem>>, vector<32x512xf32>
    tpu.vector_store %arg7[%c0_17, %c0_18], %54 {strides = array<i32>} : memref<32x512xf32, #tpu.memory_space<vmem>>, vector<32x512xf32>,
    return
  }
  func.func @transform_0(%arg0: i32) -> (i32, i32) {
    %c0_i32 = arith.constant 0 : i32
    %c0_i32_0 = arith.constant 0 : i32
    return %c0_i32, %arg0 : i32, i32
  }
  func.func @transform_1(%arg0: i32) -> (i32, i32) {
    %c0_i32 = arith.constant 0 : i32
    %c0_i32_0 = arith.constant 0 : i32
    %c0_i32_1 = arith.constant 0 : i32
    return %c0_i32, %c0_i32_0 : i32, i32
  }
  func.func @transform_2(%arg0: i32) -> (i32, i32) {
    %c0_i32 = arith.constant 0 : i32
    %c0_i32_0 = arith.constant 0 : i32
    %c0_i32_1 = arith.constant 0 : i32
    return %c0_i32, %c0_i32_0 : i32, i32
  }
  func.func @transform_3(%arg0: i32) -> (i32, i32) {
    %c0_i32 = arith.constant 0 : i32
    %c0_i32_0 = arith.constant 0 : i32
    %c0_i32_1 = arith.constant 0 : i32
    return %c0_i32, %c0_i32_0 : i32, i32
  }
  func.func @transform_4(%arg0: i32) -> (i32, i32) {
    %c0_i32 = arith.constant 0 : i32
    %c0_i32_0 = arith.constant 0 : i32
    %c0_i32_1 = arith.constant 0 : i32
    return %c0_i32, %c0_i32_0 : i32, i32
  }
  func.func @transform_5(%arg0: i32) -> (i32, i32) {
    %c0_i32 = arith.constant 0 : i32
    %c0_i32_0 = arith.constant 0 : i32
    %c0_i32_1 = arith.constant 0 : i32
    return %c0_i32, %c0_i32_0 : i32, i32
  }
  func.func @transform_6(%arg0: i32) -> (i32, i32) {
    %c0_i32 = arith.constant 0 : i32
    %c0_i32_0 = arith.constant 0 : i32
    return %c0_i32, %arg0 : i32, i32
  }
}

</mosaic_0001>

<llo_original>
// kernel: forward.1
$region0: #{forward.1}
  #allocation0 [shape = 'u32[]', space=smem, size = 0x4, offset = 0x4, fixed_abs, tag = 'smem constant byte address 0x4 - core index']
  #allocation1 [shape = 'u32[144,128]{1,0:T(1,128)}', space=vmem, size = 0x12000, scoped, tag = 'internal scratch']
  %s0 = inlined_call_operand.vmem [shape: f32[128,512], index: 0, kind: input, shape index: {}]
  %s1 = inlined_call_operand.vmem [shape: f32[208,128], index: 1, kind: input, shape index: {}]
  %s2 = inlined_call_operand.vmem [shape: f32[144,104], index: 2, kind: input, shape index: {}]
  %s3 = inlined_call_operand.vmem [shape: f32[64,64], index: 3, kind: input, shape index: {}]
  %s4 = inlined_call_operand.vmem [shape: f32[32,32], index: 4, kind: input, shape index: {}]
  %s5 = inlined_call_operand.vmem [shape: f32[88,512], index: 5, kind: input, shape index: {}]
  %s6 = inlined_call_operand.vmem [shape: f32[32,512], index: 6, kind: output, shape index: {}]
  %s7 = sld [smem:[#allocation0]]
  $region34: #{forward.1} parent=0
    _
  %s9 = ssub.s32 1, %s7
  %s10 = scalar_select 0, %s9, %s7
  // Predicated region
  $region2: #{forward.1} parent=0 // pred_check
    _
  $region3: #{forward.1} parent=0 // pred_check_branch
    %12 = sbr.rel (0) target = $region5
  $region4: #{forward.1} parent=0 // pred_region
    _
  $region5: #{forward.1} parent=0 // pred_fallthru
    _
  // Predicated region
  $region6: #{forward.1} parent=0 // pred_check
    _
  $region7: #{forward.1} parent=0 // pred_check_branch
    %14 = sbr.rel (0) target = $region9
  $region8: #{forward.1} parent=0 // pred_region
    _
  $region9: #{forward.1} parent=0 // pred_fallthru
    _
  // Predicated region
  $region10: #{forward.1} parent=0 // pred_check
    _
  $region11: #{forward.1} parent=0 // pred_check_branch
    %16 = sbr.rel (0) target = $region13
  $region12: #{forward.1} parent=0 // pred_region
    _
  $region13: #{forward.1} parent=0 // pred_fallthru
    _
  // Predicated region
  $region14: #{forward.1} parent=0 // pred_check
    _
  $region15: #{forward.1} parent=0 // pred_check_branch
    %18 = sbr.rel (0) target = $region17
  $region16: #{forward.1} parent=0 // pred_region
    _
  $region17: #{forward.1} parent=0 // pred_fallthru
    _
  // Predicated region
  $region18: #{forward.1} parent=0 // pred_check
    _
  $region19: #{forward.1} parent=0 // pred_check_branch
    %20 = sbr.rel (0) target = $region21
  $region20: #{forward.1} parent=0 // pred_region
    _
  $region21: #{forward.1} parent=0 // pred_fallthru
    _
  // Predicated region
  $region22: #{forward.1} parent=0 // pred_check
    _
  $region23: #{forward.1} parent=0 // pred_check_branch
    %22 = sbr.rel (0) target = $region25
  $region24: #{forward.1} parent=0 // pred_region
    _
  $region25: #{forward.1} parent=0 // pred_fallthru
    _
  %v23 = vld [vmem:[%s5] sm:$0xff]
  %v24 = vld [vmem:[%s5 + $0x8] sm:$0xff]
  %v25 = vld [vmem:[%s5 + $0x10] sm:$0xff]
  %v26 = vld [vmem:[%s5 + $0x18] sm:$0xff]
  %v27 = vld [vmem:[%s5 + $0x20] sm:$0xff]
  %v28 = vld [vmem:[%s5 + $0x28] sm:$0xff]
  %v29 = vld [vmem:[%s5 + $0x30] sm:$0xff]
  %v30 = vld [vmem:[%s5 + $0x38] sm:$0xff]
  %v31 = vld [vmem:[%s5 + $0x40] sm:$0xff]
  %v32 = vld [vmem:[%s5 + $0x48] sm:$0xff]
  %v33 = vld [vmem:[%s5 + $0x50] sm:$0xff]
  %v34 = vld [vmem:[%s5 + $0x58] sm:$0xff]
  %v35 = vld [vmem:[%s5 + $0x60] sm:$0xff]
  %v36 = vld [vmem:[%s5 + $0x68] sm:$0xff]
  %v37 = vld [vmem:[%s5 + $0x70] sm:$0xff]
  %v38 = vld [vmem:[%s5 + $0x78] sm:$0xff]
  %v39 = vld [vmem:[%s5 + $0x80] sm:$0xff]
  %v40 = vld [vmem:[%s5 + $0x88] sm:$0xff]
  %v41 = vld [vmem:[%s5 + $0x90] sm:$0xff]
  %v42 = vld [vmem:[%s5 + $0x98] sm:$0xff]
  %v43 = vld [vmem:[%s5 + $0xa0] sm:$0xff]
  %v44 = vld [vmem:[%s5 + $0xa8] sm:$0xff]
  %v45 = vld [vmem:[%s5 + $0xb0] sm:$0xff]
  %v46 = vld [vmem:[%s5 + $0xb8] sm:$0xff]
  %v47 = vld [vmem:[%s5 + $0xc0] sm:$0xff]
  %v48 = vld [vmem:[%s5 + $0xc8] sm:$0xff]
  %v49 = vld [vmem:[%s5 + $0xd0] sm:$0xff]
  %v50 = vld [vmem:[%s5 + $0xd8] sm:$0xff]
  %v51 = vld [vmem:[%s5 + $0xe0] sm:$0xff]
  %v52 = vld [vmem:[%s5 + $0xe8] sm:$0xff]
  %v53 = vld [vmem:[%s5 + $0xf0] sm:$0xff]
  %v54 = vld [vmem:[%s5 + $0xf8] sm:$0xff]
  %v55 = vld [vmem:[%s5 + $0x100] sm:$0xff]
  %v56 = vld [vmem:[%s5 + $0x108] sm:$0xff]
  %v57 = vld [vmem:[%s5 + $0x110] sm:$0xff]
  %v58 = vld [vmem:[%s5 + $0x118] sm:$0xff]
  %v59 = vld [vmem:[%s5 + $0x120] sm:$0xff]
  %v60 = vld [vmem:[%s5 + $0x128] sm:$0xff]
  %v61 = vld [vmem:[%s5 + $0x130] sm:$0xff]
  %v62 = vld [vmem:[%s5 + $0x138] sm:$0xff]
  %v63 = vld [vmem:[%s5 + $0x140] sm:$0xff]
  %v64 = vld [vmem:[%s5 + $0x148] sm:$0xff]
  %v65 = vld [vmem:[%s5 + $0x150] sm:$0xff]
  %v66 = vld [vmem:[%s5 + $0x158] sm:$0xff]
  %v67 = vld [vmem:[%s0] sm:$0xff]
  %v68 = vld [vmem:[%s0 + $0x8] sm:$0xff]
  %v69 = vld [vmem:[%s0 + $0x10] sm:$0xff]
  %v70 = vld [vmem:[%s0 + $0x18] sm:$0xff]
  %v71 = vld [vmem:[%s0 + $0x20] sm:$0xff]
  %v72 = vld [vmem:[%s0 + $0x28] sm:$0xff]
  %v73 = vld [vmem:[%s0 + $0x30] sm:$0xff]
  %v74 = vld [vmem:[%s0 + $0x38] sm:$0xff]
  %v75 = vld [vmem:[%s0 + $0x40] sm:$0xff]
  %v76 = vld [vmem:[%s0 + $0x48] sm:$0xff]
  %v77 = vld [vmem:[%s0 + $0x50] sm:$0xff]
  %v78 = vld [vmem:[%s0 + $0x58] sm:$0xff]
  %v79 = vld [vmem:[%s0 + $0x60] sm:$0xff]
  %v80 = vld [vmem:[%s0 + $0x68] sm:$0xff]
  %v81 = vld [vmem:[%s0 + $0x70] sm:$0xff]
  %v82 = vld [vmem:[%s0 + $0x78] sm:$0xff]
  %v83 = vld [vmem:[%s0 + $0x80] sm:$0xff]
  %v84 = vld [vmem:[%s0 + $0x88] sm:$0xff]
  %v85 = vld [vmem:[%s0 + $0x90] sm:$0xff]
  %v86 = vld [vmem:[%s0 + $0x98] sm:$0xff]
  %v87 = vld [vmem:[%s0 + $0xa0] sm:$0xff]
  %v88 = vld [vmem:[%s0 + $0xa8] sm:$0xff]
  %v89 = vld [vmem:[%s0 + $0xb0] sm:$0xff]
  %v90 = vld [vmem:[%s0 + $0xb8] sm:$0xff]
  %v91 = vld [vmem:[%s0 + $0xc0] sm:$0xff]
  %v92 = vld [vmem:[%s0 + $0xc8] sm:$0xff]
  %v93 = vld [vmem:[%s0 + $0xd0] sm:$0xff]
  %v94 = vld [vmem:[%s0 + $0xd8] sm:$0xff]
  %v95 = vld [vmem:[%s0 + $0xe0] sm:$0xff]
  %v96 = vld [vmem:[%s0 + $0xe8] sm:$0xff]
  %v97 = vld [vmem:[%s0 + $0xf0] sm:$0xff]
  %v98 = vld [vmem:[%s0 + $0xf8] sm:$0xff]
  %v99 = vld [vmem:[%s0 + $0x100] sm:$0xff]
  %v100 = vld [vmem:[%s0 + $0x108] sm:$0xff]
  %v101 = vld [vmem:[%s0 + $0x110] sm:$0xff]
  %v102 = vld [vmem:[%s0 + $0x118] sm:$0xff]
  %v103 = vld [vmem:[%s0 + $0x120] sm:$0xff]
  %v104 = vld [vmem:[%s0 + $0x128] sm:$0xff]
  %v105 = vld [vmem:[%s0 + $0x130] sm:$0xff]
  %v106 = vld [vmem:[%s0 + $0x138] sm:$0xff]
  %v107 = vld [vmem:[%s0 + $0x140] sm:$0xff]
  %v108 = vld [vmem:[%s0 + $0x148] sm:$0xff]
  %v109 = vld [vmem:[%s0 + $0x150] sm:$0xff]
  %v110 = vld [vmem:[%s0 + $0x158] sm:$0xff]
  %v111 = vld [vmem:[%s0 + $0x160] sm:$0xff]
  %v112 = vld [vmem:[%s0 + $0x168] sm:$0xff]
  %v113 = vld [vmem:[%s0 + $0x170] sm:$0xff]
  %v114 = vld [vmem:[%s0 + $0x178] sm:$0xff]
  %v115 = vld [vmem:[%s0 + $0x180] sm:$0xff]
  %v116 = vld [vmem:[%s0 + $0x188] sm:$0xff]
  %v117 = vld [vmem:[%s0 + $0x190] sm:$0xff]
  %v118 = vld [vmem:[%s0 + $0x198] sm:$0xff]
  %v119 = vld [vmem:[%s0 + $0x1a0] sm:$0xff]
  %v120 = vld [vmem:[%s0 + $0x1a8] sm:$0xff]
  %v121 = vld [vmem:[%s0 + $0x1b0] sm:$0xff]
  %v122 = vld [vmem:[%s0 + $0x1b8] sm:$0xff]
  %v123 = vld [vmem:[%s0 + $0x1c0] sm:$0xff]
  %v124 = vld [vmem:[%s0 + $0x1c8] sm:$0xff]
  %v125 = vld [vmem:[%s0 + $0x1d0] sm:$0xff]
  %v126 = vld [vmem:[%s0 + $0x1d8] sm:$0xff]
  %v127 = vld [vmem:[%s0 + $0x1e0] sm:$0xff]
  %v128 = vld [vmem:[%s0 + $0x1e8] sm:$0xff]
  %v129 = vld [vmem:[%s0 + $0x1f0] sm:$0xff]
  %v130 = vld [vmem:[%s0 + $0x1f8] sm:$0xff]
  %v131 = vld [vmem:[%s1] sm:$0xff]
  %v132 = vld [vmem:[%s1 + $0x8] sm:$0xff]
  %v133 = vld [vmem:[%s1 + $0x10] sm:$0xff]
  %v134 = vld [vmem:[%s1 + $0x18] sm:$0xff]
  %v135 = vld [vmem:[%s1 + $0x20] sm:$0xff]
  %v136 = vld [vmem:[%s1 + $0x28] sm:$0xff]
  %v137 = vld [vmem:[%s1 + $0x30] sm:$0xff]
  %v138 = vld [vmem:[%s1 + $0x38] sm:$0xff]
  %v139 = vld [vmem:[%s1 + $0x40] sm:$0xff]
  %v140 = vld [vmem:[%s1 + $0x48] sm:$0xff]
  %v141 = vld [vmem:[%s1 + $0x50] sm:$0xff]
  %v142 = vld [vmem:[%s1 + $0x58] sm:$0xff]
  %v143 = vld [vmem:[%s1 + $0x60] sm:$0xff]
  %v144 = vld [vmem:[%s1 + $0x68] sm:$0xff]
  %v145 = vld [vmem:[%s1 + $0x70] sm:$0xff]
  %v146 = vld [vmem:[%s1 + $0x78] sm:$0xff]
  %v147 = vld [vmem:[%s1 + $0x80] sm:$0xff]
  %v148 = vld [vmem:[%s1 + $0x88] sm:$0xff]
  %v149 = vld [vmem:[%s1 + $0x90] sm:$0xff]
  %v150 = vld [vmem:[%s1 + $0x98] sm:$0xff]
  %v151 = vld [vmem:[%s1 + $0xa0] sm:$0xff]
  %v152 = vld [vmem:[%s1 + $0xa8] sm:$0xff]
  %v153 = vld [vmem:[%s1 + $0xb0] sm:$0xff]
  %v154 = vld [vmem:[%s1 + $0xb8] sm:$0xff]
  %v155 = vld [vmem:[%s1 + $0xc0] sm:$0xff]
  %v156 = vld [vmem:[%s1 + $0xc8] sm:$0xff]
  %157 = vmatprep.subr.mxu0 %v68
  %158 = vmatpush1.msra.mxu0 %v67
  %159 = vmatprep.subr.mxu0 %v72
  %160 = vmatpush1.msra.mxu0 %v71
  %161 = vmatprep.subr.mxu0 %v76
  %162 = vmatpush1.msra.mxu0 %v75
  %163 = vmatprep.subr.mxu0 %v80
  %164 = vmatpush1.msra.mxu0 %v79
  %165 = vmatprep.subr.mxu0 %v84
  %166 = vmatpush1.msra.mxu0 %v83
  %167 = vmatprep.subr.mxu0 %v88
  %168 = vmatpush1.msra.mxu0 %v87
  %169 = vmatprep.subr.mxu0 %v92
  %170 = vmatpush1.msra.mxu0 %v91
  %171 = vmatprep.subr.mxu0 %v96
  %172 = vmatpush1.msra.mxu0 %v95
  %173 = vmatprep.subr.mxu0 %v100
  %174 = vmatpush1.msra.mxu0 %v99
  %175 = vmatprep.subr.mxu0 %v104
  %176 = vmatpush1.msra.mxu0 %v103
  %177 = vmatprep.subr.mxu0 %v108
  %178 = vmatpush1.msra.mxu0 %v107
  %179 = vmatprep.subr.mxu0 %v112
  %180 = vmatpush1.msra.mxu0 %v111
  %181 = vmatprep.subr.mxu0 %v116
  %182 = vmatpush1.msra.mxu0 %v115
  %183 = vmatprep.subr.mxu0 %v120
  %184 = vmatpush1.msra.mxu0 %v119
  %185 = vmatprep.subr.mxu0 %v124
  %186 = vmatpush1.msra.mxu0 %v123
  %187 = vmatprep.subr.mxu0 %v128
  %188 = vmatpush1.msra.mxu0 %v127
  %189 = vmatprep.subr.mxu0 0.0
  %190 = vmatpush1.msra.mxu0 0.0
  %191 = vmatprep.subr.mxu0 0.0
  %192 = vmatpush1.msra.mxu0 0.0
  %193 = vmatprep.subr.mxu0 0.0
  %194 = vmatpush1.msra.mxu0 0.0
  %195 = vmatprep.subr.mxu0 0.0
  %196 = vmatpush1.msra.mxu0 0.0
  %197 = vmatprep.subr.mxu0 0.0
  %198 = vmatpush1.msra.mxu0 0.0
  %199 = vmatprep.subr.mxu0 0.0
  %200 = vmatpush1.msra.mxu0 0.0
  %201 = vmatprep.subr.mxu0 0.0
  %202 = vmatpush1.msra.mxu0 0.0
  %203 = vmatprep.subr.mxu0 0.0
  %204 = vmatpush1.msra.mxu0 0.0
  %205 = vmatprep.subr.mxu0 0.0
  %206 = vmatpush1.msra.mxu0 0.0
  %207 = vmatprep.subr.mxu0 0.0
  %208 = vmatpush1.msra.mxu0 0.0
  %209 = vmatprep.subr.mxu0 0.0
  %210 = vmatpush1.msra.mxu0 0.0
  %211 = vmatprep.subr.mxu0 0.0
  %212 = vmatpush1.msra.mxu0 0.0
  %213 = vmatprep.subr.mxu0 0.0
  %214 = vmatpush1.msra.mxu0 0.0
  %215 = vmatprep.subr.mxu0 0.0
  %216 = vmatpush1.msra.mxu0 0.0
  %217 = vmatprep.subr.mxu0 0.0
  %218 = vmatpush1.msra.mxu0 0.0
  %219 = vmatprep.subr.mxu0 0.0
  %220 = vmatpush1.msra.mxu0 0.0
  %221 = vmatprep.mubr.f32.mxu0 0.0
  %222 = vmatmul.mubr.f32.gmra.mrb[0].mxu0 %v131
  %v223 = vpop.f32.mrb[0].mxu0
  %v224 = vadd.f32 0.0, %v223
  %v225 = vpop.f32.mrb[0].mxu0
  %v226 = vadd.f32 0.0, %v225
  %227 = vmatprep.mubr.f32.mxu0 0.0
  %228 = vmatmul.mubr.f32.gmra.mrb[0].mxu0 %v132
  %v229 = vpop.f32.mrb[0].mxu0
  %v230 = vadd.f32 0.0, %v229
  %v231 = vpop.f32.mrb[0].mxu0
  %v232 = vadd.f32 0.0, %v231
  %233 = vmatprep.mubr.f32.mxu0 0.0
  %234 = vmatmul.mubr.f32.gmra.mrb[0].mxu0 %v133
  %v235 = vpop.f32.mrb[0].mxu0
  %v236 = vadd.f32 0.0, %v235
  %v237 = vpop.f32.mrb[0].mxu0
  %v238 = vadd.f32 0.0, %v237
  %239 = vmatprep.mubr.f32.mxu0 0.0
  %240 = vmatmul.mubr.f32.gmra.mrb[0].mxu0 %v134
  %v241 = vpop.f32.mrb[0].mxu0
  %v242 = vadd.f32 0.0, %v241
  %v243 = vpop.f32.mrb[0].mxu0
  %v244 = vadd.f32 0.0, %v243
  %245 = vmatprep.mubr.f32.mxu0 0.0
  %246 = vmatmul.mubr.f32.gmra.mrb[0].mxu0 %v135
  %v247 = vpop.f32.mrb[0].mxu0
  %v248 = vadd.f32 0.0, %v247
  %v249 = vpop.f32.mrb[0].mxu0
  %v250 = vadd.f32 0.0, %v249
  %251 = vmatprep.mubr.f32.mxu0 0.0
  %252 = vmatmul.mubr.f32.gmra.mrb[0].mxu0 %v136
  %v253 = vpop.f32.mrb[0].mxu0
  %v254 = vadd.f32 0.0, %v253
  %v255 = vpop.f32.mrb[0].mxu0
  %v256 = vadd.f32 0.0, %v255
  %257 = vmatprep.mubr.f32.mxu0 0.0
  %258 = vmatmul.mubr.f32.gmra.mrb[0].mxu0 %v137
  %v259 = vpop.f32.mrb[0].mxu0
  %v260 = vadd.f32 0.0, %v259
  %v261 = vpop.f32.mrb[0].mxu0
  %v262 = vadd.f32 0.0, %v261
  %263 = vmatprep.mubr.f32.mxu0 0.0
  %264 = vmatmul.mubr.f32.gmra.mrb[0].mxu0 %v138
  %v265 = vpop.f32.mrb[0].mxu0
  %v266 = vadd.f32 0.0, %v265
  %v267 = vpop.f32.mrb[0].mxu0
  %v268 = vadd.f32 0.0, %v267
  %269 = vmatprep.mubr.f32.mxu0 0.0
  %270 = vmatmul.mubr.f32.gmra.mrb[0].mxu0 %v139
  %v271 = vpop.f32.mrb[0].mxu0
  %v272 = vadd.f32 0.0, %v271
  %v273 = vpop.f32.mrb[0].mxu0
  %v274 = vadd.f32 0.0, %v273
  %275 = vmatprep.mubr.f32.mxu0 0.0
  %276 = vmatmul.mubr.f32.gmra.mrb[0].mxu0 %v140
  %v277 = vpop.f32.mrb[0].mxu0
  %v278 = vadd.f32 0.0, %v277
  %v279 = vpop.f32.mrb[0].mxu0
  %v280 = vadd.f32 0.0, %v279
  %281 = vmatprep.mubr.f32.mxu0 0.0
  %282 = vmatmul.mubr.f32.gmra.mrb[0].mxu0 %v141
  %v283 = vpop.f32.mrb[0].mxu0
  %v284 = vadd.f32 0.0, %v283
  %v285 = vpop.f32.mrb[0].mxu0
  %v286 = vadd.f32 0.0, %v285
  %287 = vmatprep.mubr.f32.mxu0 0.0
  %288 = vmatmul.mubr.f32.gmra.mrb[0].mxu0 %v142
  %v289 = vpop.f32.mrb[0].mxu0
  %v290 = vadd.f32 0.0, %v289
  %v291 = vpop.f32.mrb[0].mxu0
  %v292 = vadd.f32 0.0, %v291
  %293 = vmatprep.mubr.f32.mxu0 0.0
  %294 = vmatmul.mubr.f32.gmra.mrb[0].mxu0 %v143
  %v295 = vpop.f32.mrb[0].mxu0
  %v296 = vadd.f32 0.0, %v295
  %v297 = vpop.f32.mrb[0].mxu0
  %v298 = vadd.f32 0.0, %v297
  %299 = vmatprep.mubr.f32.mxu0 0.0
  %300 = vmatmul.mubr.f32.gmra.mrb[0].mxu0 %v144
  %v301 = vpop.f32.mrb[0].mxu0
  %v302 = vadd.f32 0.0, %v301
  %v303 = vpop.f32.mrb[0].mxu0
  %v304 = vadd.f32 0.0, %v303
  %305 = vmatprep.mubr.f32.mxu0 0.0
  %306 = vmatmul.mubr.f32.gmra.mrb[0].mxu0 %v145
  %v307 = vpop.f32.mrb[0].mxu0
  %v308 = vadd.f32 0.0, %v307
  %v309 = vpop.f32.mrb[0].mxu0
  %v310 = vadd.f32 0.0, %v309
  %311 = vmatprep.mubr.f32.mxu0 0.0
  %312 = vmatmul.mubr.f32.gmra.mrb[0].mxu0 %v146
  %v313 = vpop.f32.mrb[0].mxu0
  %v314 = vadd.f32 0.0, %v313
  %v315 = vpop.f32.mrb[0].mxu0
  %v316 = vadd.f32 0.0, %v315
  %317 = vmatprep.mubr.f32.mxu0 0.0
  %318 = vmatmul.mubr.f32.gmra.mrb[0].mxu0 %v147
  %v319 = vpop.f32.mrb[0].mxu0
  %v320 = vadd.f32 0.0, %v319
  %v321 = vpop.f32.mrb[0].mxu0
  %v322 = vadd.f32 0.0, %v321
  %323 = vmatprep.mubr.f32.mxu0 0.0
  %324 = vmatmul.mubr.f32.gmra.mrb[0].mxu0 %v148
  %v325 = vpop.f32.mrb[0].mxu0
  %v326 = vadd.f32 0.0, %v325
  %v327 = vpop.f32.mrb[0].mxu0
  %v328 = vadd.f32 0.0, %v327
  %329 = vmatprep.mubr.f32.mxu0 0.0
  %330 = vmatmul.mubr.f32.gmra.mrb[0].mxu0 %v149
  %v331 = vpop.f32.mrb[0].mxu0
  %v332 = vadd.f32 0.0, %v331
  %v333 = vpop.f32.mrb[0].mxu0
  %v334 = vadd.f32 0.0, %v333
  %335 = vmatprep.mubr.f32.mxu0 0.0
  %336 = vmatmul.mubr.f32.gmra.mrb[0].mxu0 %v150
  %v337 = vpop.f32.mrb[0].mxu0
  %v338 = vadd.f32 0.0, %v337
  %v339 = vpop.f32.mrb[0].mxu0
  %v340 = vadd.f32 0.0, %v339
  %341 = vmatprep.mubr.f32.mxu0 0.0
  %342 = vmatmul.mubr.f32.gmra.mrb[0].mxu0 %v151
  %v343 = vpop.f32.mrb[0].mxu0
  %v344 = vadd.f32 0.0, %v343
  %v345 = vpop.f32.mrb[0].mxu0
  %v346 = vadd.f32 0.0, %v345
  %347 = vmatprep.mubr.f32.mxu0 0.0
  %348 = vmatmul.mubr.f32.gmra.mrb[0].mxu0 %v152
  %v349 = vpop.f32.mrb[0].mxu0
  %v350 = vadd.f32 0.0, %v349
  %v351 = vpop.f32.mrb[0].mxu0
  %v352 = vadd.f32 0.0, %v351
  %353 = vmatprep.mubr.f32.mxu0 0.0
  %354 = vmatmul.mubr.f32.gmra.mrb[0].mxu0 %v153
  %v355 = vpop.f32.mrb[0].mxu0
  %v356 = vadd.f32 0.0, %v355
  %v357 = vpop.f32.mrb[0].mxu0
  %v358 = vadd.f32 0.0, %v357
  %359 = vmatprep.mubr.f32.mxu0 0.0
  %360 = vmatmul.mubr.f32.gmra.mrb[0].mxu0 %v154
  %v361 = vpop.f32.mrb[0].mxu0
  %v362 = vadd.f32 0.0, %v361
  %v363 = vpop.f32.mrb[0].mxu0
  %v364 = vadd.f32 0.0, %v363
  %365 = vmatprep.mubr.f32.mxu0 0.0
  %366 = vmatmul.mubr.f32.gmra.mrb[0].mxu0 %v155
  %v367 = vpop.f32.mrb[0].mxu0
  %v368 = vadd.f32 0.0, %v367
  %v369 = vpop.f32.mrb[0].mxu0
  %v370 = vadd.f32 0.0, %v369
  %371 = vmatprep.mubr.f32.mxu0 0.0
  %372 = vmatmul.mubr.f32.gmra.mrb[0].mxu0 %v156
  %v373 = vpop.f32.mrb[0].mxu0
  %v374 = vadd.f32 0.0, %v373
  %v375 = vpop.f32.mrb[0].mxu0
  %v376 = vadd.f32 0.0, %v375
  %377 = vdwg.mxu0
  %378 = vmatprep.subr.mxu0 %v70
  %379 = vmatpush1.msra.mxu0 %v69
  %380 = vmatprep.subr.mxu0 %v74
  %381 = vmatpush1.msra.mxu0 %v73
  %382 = vmatprep.subr.mxu0 %v78
  %383 = vmatpush1.msra.mxu0 %v77
  %384 = vmatprep.subr.mxu0 %v82
  %385 = vmatpush1.msra.mxu0 %v81
  %386 = vmatprep.subr.mxu0 %v86
  %387 = vmatpush1.msra.mxu0 %v85
  %388 = vmatprep.subr.mxu0 %v90
  %389 = vmatpush1.msra.mxu0 %v89
  %390 = vmatprep.subr.mxu0 %v94
  %391 = vmatpush1.msra.mxu0 %v93
  %392 = vmatprep.subr.mxu0 %v98
  %393 = vmatpush1.msra.mxu0 %v97
  %394 = vmatprep.subr.mxu0 %v102
  %395 = vmatpush1.msra.mxu0 %v101
  %396 = vmatprep.subr.mxu0 %v106
  %397 = vmatpush1.msra.mxu0 %v105
  %398 = vmatprep.subr.mxu0 %v110
  %399 = vmatpush1.msra.mxu0 %v109
  %400 = vmatprep.subr.mxu0 %v114
  %401 = vmatpush1.msra.mxu0 %v113
  %402 = vmatprep.subr.mxu0 %v118
  %403 = vmatpush1.msra.mxu0 %v117
  %404 = vmatprep.subr.mxu0 %v122
  %405 = vmatpush1.msra.mxu0 %v121
  %406 = vmatprep.subr.mxu0 %v126
  %407 = vmatpush1.msra.mxu0 %v125
  %408 = vmatprep.subr.mxu0 %v130
  %409 = vmatpush1.msra.mxu0 %v129
  %410 = vmatprep.subr.mxu0 0.0
  %411 = vmatpush1.msra.mxu0 0.0
  %412 = vmatprep.subr.mxu0 0.0
  %413 = vmatpush1.msra.mxu0 0.0
  %414 = vmatprep.subr.mxu0 0.0
  %415 = vmatpush1.msra.mxu0 0.0
  %416 = vmatprep.subr.mxu0 0.0
  %417 = vmatpush1.msra.mxu0 0.0
  %418 = vmatprep.subr.mxu0 0.0
  %419 = vmatpush1.msra.mxu0 0.0
  %420 = vmatprep.subr.mxu0 0.0
  %421 = vmatpush1.msra.mxu0 0.0
  %422 = vmatprep.subr.mxu0 0.0
  %423 = vmatpush1.msra.mxu0 0.0
  %424 = vmatprep.subr.mxu0 0.0
  %425 = vmatpush1.msra.mxu0 0.0
  %426 = vmatprep.subr.mxu0 0.0
  %427 = vmatpush1.msra.mxu0 0.0
  %428 = vmatprep.subr.mxu0 0.0
  %429 = vmatpush1.msra.mxu0 0.0
  %430 = vmatprep.subr.mxu0 0.0
  %431 = vmatpush1.msra.mxu0 0.0
  %432 = vmatprep.subr.mxu0 0.0
  %433 = vmatpush1.msra.mxu0 0.0
  %434 = vmatprep.subr.mxu0 0.0
  %435 = vmatpush1.msra.mxu0 0.0
  %436 = vmatprep.subr.mxu0 0.0
  %437 = vmatpush1.msra.mxu0 0.0
  %438 = vmatprep.subr.mxu0 0.0
  %439 = vmatpush1.msra.mxu0 0.0
  %440 = vmatprep.subr.mxu0 0.0
  %441 = vmatpush1.msra.mxu0 0.0
  %442 = vmatprep.mubr.f32.mxu0 0.0
  %443 = vmatmul.mubr.f32.gmra.mrb[0].mxu0 %v131
  %v444 = vpop.f32.mrb[0].mxu0
  %v445 = vadd.f32 0.0, %v444
  %v446 = vpop.f32.mrb[0].mxu0
  %v447 = vadd.f32 0.0, %v446
  %448 = vmatprep.mubr.f32.mxu0 0.0
  %449 = vmatmul.mubr.f32.gmra.mrb[0].mxu0 %v132
  %v450 = vpop.f32.mrb[0].mxu0
  %v451 = vadd.f32 0.0, %v450
  %v452 = vpop.f32.mrb[0].mxu0
  %v453 = vadd.f32 0.0, %v452
  %454 = vmatprep.mubr.f32.mxu0 0.0
  %455 = vmatmul.mubr.f32.gmra.mrb[0].mxu0 %v133
  %v456 = vpop.f32.mrb[0].mxu0
  %v457 = vadd.f32 0.0, %v456
  %v458 = vpop.f32.mrb[0].mxu0
  %v459 = vadd.f32 0.0, %v458
  %460 = vmatprep.mubr.f32.mxu0 0.0
  %461 = vmatmul.mubr.f32.gmra.mrb[0].mxu0 %v134
  %v462 = vpop.f32.mrb[0].mxu0
  %v463 = vadd.f32 0.0, %v462
  %v464 = vpop.f32.mrb[0].mxu0
  %v465 = vadd.f32 0.0, %v464
  %466 = vmatprep.mubr.f32.mxu0 0.0
  %467 = vmatmul.mubr.f32.gmra.mrb[0].mxu0 %v135
  %v468 = vpop.f32.mrb[0].mxu0
  %v469 = vadd.f32 0.0, %v468
  %v470 = vpop.f32.mrb[0].mxu0
  %v471 = vadd.f32 0.0, %v470
  %472 = vmatprep.mubr.f32.mxu0 0.0
  %473 = vmatmul.mubr.f32.gmra.mrb[0].mxu0 %v136
  %v474 = vpop.f32.mrb[0].mxu0
  %v475 = vadd.f32 0.0, %v474
  %v476 = vpop.f32.mrb[0].mxu0
  %v477 = vadd.f32 0.0, %v476
  %478 = vmatprep.mubr.f32.mxu0 0.0
  %479 = vmatmul.mubr.f32.gmra.mrb[0].mxu0 %v137
  %v480 = vpop.f32.mrb[0].mxu0
  %v481 = vadd.f32 0.0, %v480
  %v482 = vpop.f32.mrb[0].mxu0
  %v483 = vadd.f32 0.0, %v482
  %484 = vmatprep.mubr.f32.mxu0 0.0
  %485 = vmatmul.mubr.f32.gmra.mrb[0].mxu0 %v138
  %v486 = vpop.f32.mrb[0].mxu0
  %v487 = vadd.f32 0.0, %v486
  %v488 = vpop.f32.mrb[0].mxu0
  %v489 = vadd.f32 0.0, %v488
  %490 = vmatprep.mubr.f32.mxu0 0.0
  %491 = vmatmul.mubr.f32.gmra.mrb[0].mxu0 %v139
  %v492 = vpop.f32.mrb[0].mxu0
  %v493 = vadd.f32 0.0, %v492
  %v494 = vpop.f32.mrb[0].mxu0
  %v495 = vadd.f32 0.0, %v494
  %496 = vmatprep.mubr.f32.mxu0 0.0
  %497 = vmatmul.mubr.f32.gmra.mrb[0].mxu0 %v140
  %v498 = vpop.f32.mrb[0].mxu0
  %v499 = vadd.f32 0.0, %v498
  %v500 = vpop.f32.mrb[0].mxu0
  %v501 = vadd.f32 0.0, %v500
  %502 = vmatprep.mubr.f32.mxu0 0.0
  %503 = vmatmul.mubr.f32.gmra.mrb[0].mxu0 %v141
  %v504 = vpop.f32.mrb[0].mxu0
  %v505 = vadd.f32 0.0, %v504
  %v506 = vpop.f32.mrb[0].mxu0
  %v507 = vadd.f32 0.0, %v506
  %508 = vmatprep.mubr.f32.mxu0 0.0
  %509 = vmatmul.mubr.f32.gmra.mrb[0].mxu0 %v142
  %v510 = vpop.f32.mrb[0].mxu0
  %v511 = vadd.f32 0.0, %v510
  %v512 = vpop.f32.mrb[0].mxu0
  %v513 = vadd.f32 0.0, %v512
  %514 = vmatprep.mubr.f32.mxu0 0.0
  %515 = vmatmul.mubr.f32.gmra.mrb[0].mxu0 %v143
  %v516 = vpop.f32.mrb[0].mxu0
  %v517 = vadd.f32 0.0, %v516
  %v518 = vpop.f32.mrb[0].mxu0
  %v519 = vadd.f32 0.0, %v518
  %520 = vmatprep.mubr.f32.mxu0 0.0
  %521 = vmatmul.mubr.f32.gmra.mrb[0].mxu0 %v144
  %v522 = vpop.f32.mrb[0].mxu0
  %v523 = vadd.f32 0.0, %v522
  %v524 = vpop.f32.mrb[0].mxu0
  %v525 = vadd.f32 0.0, %v524
  %526 = vmatprep.mubr.f32.mxu0 0.0
  %527 = vmatmul.mubr.f32.gmra.mrb[0].mxu0 %v145
  %v528 = vpop.f32.mrb[0].mxu0
  %v529 = vadd.f32 0.0, %v528
  %v530 = vpop.f32.mrb[0].mxu0
  %v531 = vadd.f32 0.0, %v530
  %532 = vmatprep.mubr.f32.mxu0 0.0
  %533 = vmatmul.mubr.f32.gmra.mrb[0].mxu0 %v146
  %v534 = vpop.f32.mrb[0].mxu0
  %v535 = vadd.f32 0.0, %v534
  %v536 = vpop.f32.mrb[0].mxu0
  %v537 = vadd.f32 0.0, %v536
  %538 = vmatprep.mubr.f32.mxu0 0.0
  %539 = vmatmul.mubr.f32.gmra.mrb[0].mxu0 %v147
  %v540 = vpop.f32.mrb[0].mxu0
  %v541 = vadd.f32 0.0, %v540
  %v542 = vpop.f32.mrb[0].mxu0
  %v543 = vadd.f32 0.0, %v542
  %544 = vmatprep.mubr.f32.mxu0 0.0
  %545 = vmatmul.mubr.f32.gmra.mrb[0].mxu0 %v148
  %v546 = vpop.f32.mrb[0].mxu0
  %v547 = vadd.f32 0.0, %v546
  %v548 = vpop.f32.mrb[0].mxu0
  %v549 = vadd.f32 0.0, %v548
  %550 = vmatprep.mubr.f32.mxu0 0.0
  %551 = vmatmul.mubr.f32.gmra.mrb[0].mxu0 %v149
  %v552 = vpop.f32.mrb[0].mxu0
  %v553 = vadd.f32 0.0, %v552
  %v554 = vpop.f32.mrb[0].mxu0
  %v555 = vadd.f32 0.0, %v554
  %556 = vmatprep.mubr.f32.mxu0 0.0
  %557 = vmatmul.mubr.f32.gmra.mrb[0].mxu0 %v150
  %v558 = vpop.f32.mrb[0].mxu0
  %v559 = vadd.f32 0.0, %v558
  %v560 = vpop.f32.mrb[0].mxu0
  %v561 = vadd.f32 0.0, %v560
  %562 = vmatprep.mubr.f32.mxu0 0.0
  %563 = vmatmul.mubr.f32.gmra.mrb[0].mxu0 %v151
  %v564 = vpop.f32.mrb[0].mxu0
  %v565 = vadd.f32 0.0, %v564
  %v566 = vpop.f32.mrb[0].mxu0
  %v567 = vadd.f32 0.0, %v566
  %568 = vmatprep.mubr.f32.mxu0 0.0
  %569 = vmatmul.mubr.f32.gmra.mrb[0].mxu0 %v152
  %v570 = vpop.f32.mrb[0].mxu0
  %v571 = vadd.f32 0.0, %v570
  %v572 = vpop.f32.mrb[0].mxu0
  %v573 = vadd.f32 0.0, %v572
  %574 = vmatprep.mubr.f32.mxu0 0.0
  %575 = vmatmul.mubr.f32.gmra.mrb[0].mxu0 %v153
  %v576 = vpop.f32.mrb[0].mxu0
  %v577 = vadd.f32 0.0, %v576
  %v578 = vpop.f32.mrb[0].mxu0
  %v579 = vadd.f32 0.0, %v578
  %580 = vmatprep.mubr.f32.mxu0 0.0
  %581 = vmatmul.mubr.f32.gmra.mrb[0].mxu0 %v154
  %v582 = vpop.f32.mrb[0].mxu0
  %v583 = vadd.f32 0.0, %v582
  %v584 = vpop.f32.mrb[0].mxu0
  %v585 = vadd.f32 0.0, %v584
  %586 = vmatprep.mubr.f32.mxu0 0.0
  %587 = vmatmul.mubr.f32.gmra.mrb[0].mxu0 %v155
  %v588 = vpop.f32.mrb[0].mxu0
  %v589 = vadd.f32 0.0, %v588
  %v590 = vpop.f32.mrb[0].mxu0
  %v591 = vadd.f32 0.0, %v590
  %592 = vmatprep.mubr.f32.mxu0 0.0
  %593 = vmatmul.mubr.f32.gmra.mrb[0].mxu0 %v156
  %v594 = vpop.f32.mrb[0].mxu0
  %v595 = vadd.f32 0.0, %v594
  %v596 = vpop.f32.mrb[0].mxu0
  %v597 = vadd.f32 0.0, %v596
  %598 = vdwg.mxu0
  %v599 = vadd.f32 %v224, %v23
  %v600 = vadd.f32 %v226, %v24
  %v601 = vadd.f32 %v445, %v25
  %v602 = vadd.f32 %v447, %v26
  %v603 = vadd.f32 %v230, %v23
  %v604 = vadd.f32 %v232, %v24
  %v605 = vadd.f32 %v451, %v25
  %v606 = vadd.f32 %v453, %v26
  %v607 = vadd.f32 %v236, %v23
  %v608 = vadd.f32 %v238, %v24
  %v609 = vadd.f32 %v457, %v25
  %v610 = vadd.f32 %v459, %v26
  %v611 = vadd.f32 %v242, %v23
  %v612 = vadd.f32 %v244, %v24
  %v613 = vadd.f32 %v463, %v25
  %v614 = vadd.f32 %v465, %v26
  %v615 = vadd.f32 %v248, %v23
  %v616 = vadd.f32 %v250, %v24
  %v617 = vadd.f32 %v469, %v25
  %v618 = vadd.f32 %v471, %v26
  %v619 = vadd.f32 %v254, %v23
  %v620 = vadd.f32 %v256, %v24
  %v621 = vadd.f32 %v475, %v25
  %v622 = vadd.f32 %v477, %v26
  %v623 = vadd.f32 %v260, %v23
  %v624 = vadd.f32 %v262, %v24
  %v625 = vadd.f32 %v481, %v25
  %v626 = vadd.f32 %v483, %v26
  %v627 = vadd.f32 %v266, %v23
  %v628 = vadd.f32 %v268, %v24
  %v629 = vadd.f32 %v487, %v25
  %v630 = vadd.f32 %v489, %v26
  %v631 = vadd.f32 %v272, %v23
  %v632 = vadd.f32 %v274, %v24
  %v633 = vadd.f32 %v493, %v25
  %v634 = vadd.f32 %v495, %v26
  %v635 = vadd.f32 %v278, %v23
  %v636 = vadd.f32 %v280, %v24
  %v637 = vadd.f32 %v499, %v25
  %v638 = vadd.f32 %v501, %v26
  %v639 = vadd.f32 %v284, %v23
  %v640 = vadd.f32 %v286, %v24
  %v641 = vadd.f32 %v505, %v25
  %v642 = vadd.f32 %v507, %v26
  %v643 = vadd.f32 %v290, %v23
  %v644 = vadd.f32 %v292, %v24
  %v645 = vadd.f32 %v511, %v25
  %v646 = vadd.f32 %v513, %v26
  %v647 = vadd.f32 %v296, %v23
  %v648 = vadd.f32 %v298, %v24
  %v649 = vadd.f32 %v517, %v25
  %v650 = vadd.f32 %v519, %v26
  %v651 = vadd.f32 %v302, %v23
  %v652 = vadd.f32 %v304, %v24
  %v653 = vadd.f32 %v523, %v25
  %v654 = vadd.f32 %v525, %v26
  %v655 = vadd.f32 %v308, %v23
  %v656 = vadd.f32 %v310, %v24
  %v657 = vadd.f32 %v529, %v25
  %v658 = vadd.f32 %v531, %v26
  %v659 = vadd.f32 %v314, %v23
  %v660 = vadd.f32 %v316, %v24
  %v661 = vadd.f32 %v535, %v25
  %v662 = vadd.f32 %v537, %v26
  %v663 = vadd.f32 %v320, %v23
  %v664 = vadd.f32 %v322, %v24
  %v665 = vadd.f32 %v541, %v25
  %v666 = vadd.f32 %v543, %v26
  %v667 = vadd.f32 %v326, %v23
  %v668 = vadd.f32 %v328, %v24
  %v669 = vadd.f32 %v547, %v25
  %v670 = vadd.f32 %v549, %v26
  %v671 = vadd.f32 %v332, %v23
  %v672 = vadd.f32 %v334, %v24
  %v673 = vadd.f32 %v553, %v25
  %v674 = vadd.f32 %v555, %v26
  %v675 = vadd.f32 %v338, %v23
  %v676 = vadd.f32 %v340, %v24
  %v677 = vadd.f32 %v559, %v25
  %v678 = vadd.f32 %v561, %v26
  %v679 = vadd.f32 %v344, %v23
  %v680 = vadd.f32 %v346, %v24
  %v681 = vadd.f32 %v565, %v25
  %v682 = vadd.f32 %v567, %v26
  %v683 = vadd.f32 %v350, %v23
  %v684 = vadd.f32 %v352, %v24
  %v685 = vadd.f32 %v571, %v25
  %v686 = vadd.f32 %v573, %v26
  %v687 = vadd.f32 %v356, %v23
  %v688 = vadd.f32 %v358, %v24
  %v689 = vadd.f32 %v577, %v25
  %v690 = vadd.f32 %v579, %v26
  %v691 = vadd.f32 %v362, %v23
  %v692 = vadd.f32 %v364, %v24
  %v693 = vadd.f32 %v583, %v25
  %v694 = vadd.f32 %v585, %v26
  %v695 = vadd.f32 %v368, %v23
  %v696 = vadd.f32 %v370, %v24
  %v697 = vadd.f32 %v589, %v25
  %v698 = vadd.f32 %v591, %v26
  %v699 = vadd.f32 %v374, %v23
  %v700 = vadd.f32 %v376, %v24
  %v701 = vadd.f32 %v595, %v25
  %v702 = vadd.f32 %v597, %v26
  %v703 = vmax.f32 %v599, 0.0
  %v704 = vmax.f32 %v600, 0.0
  %v705 = vmax.f32 %v601, 0.0
  %v706 = vmax.f32 %v602, 0.0
  %v707 = vmax.f32 %v603, 0.0
  %v708 = vmax.f32 %v604, 0.0
  %v709 = vmax.f32 %v605, 0.0
  %v710 = vmax.f32 %v606, 0.0
  %v711 = vmax.f32 %v607, 0.0
  %v712 = vmax.f32 %v608, 0.0
  %v713 = vmax.f32 %v609, 0.0
  %v714 = vmax.f32 %v610, 0.0
  %v715 = vmax.f32 %v611, 0.0
  %v716 = vmax.f32 %v612, 0.0
  %v717 = vmax.f32 %v613, 0.0
  %v718 = vmax.f32 %v614, 0.0
  %v719 = vmax.f32 %v615, 0.0
  %v720 = vmax.f32 %v616, 0.0
  %v721 = vmax.f32 %v617, 0.0
  %v722 = vmax.f32 %v618, 0.0
  %v723 = vmax.f32 %v619, 0.0
  %v724 = vmax.f32 %v620, 0.0
  %v725 = vmax.f32 %v621, 0.0
  %v726 = vmax.f32 %v622, 0.0
  %v727 = vmax.f32 %v623, 0.0
  %v728 = vmax.f32 %v624, 0.0
  %v729 = vmax.f32 %v625, 0.0
  %v730 = vmax.f32 %v626, 0.0
  %v731 = vmax.f32 %v627, 0.0
  %v732 = vmax.f32 %v628, 0.0
  %v733 = vmax.f32 %v629, 0.0
  %v734 = vmax.f32 %v630, 0.0
  %v735 = vmax.f32 %v631, 0.0
  %v736 = vmax.f32 %v632, 0.0
  %v737 = vmax.f32 %v633, 0.0
  %v738 = vmax.f32 %v634, 0.0
  %v739 = vmax.f32 %v635, 0.0
  %v740 = vmax.f32 %v636, 0.0
  %v741 = vmax.f32 %v637, 0.0
  %v742 = vmax.f32 %v638, 0.0
  %v743 = vmax.f32 %v639, 0.0
  %v744 = vmax.f32 %v640, 0.0
  %v745 = vmax.f32 %v641, 0.0
  %v746 = vmax.f32 %v642, 0.0
  %v747 = vmax.f32 %v643, 0.0
  %v748 = vmax.f32 %v644, 0.0
  %v749 = vmax.f32 %v645, 0.0
  %v750 = vmax.f32 %v646, 0.0
  %v751 = vmax.f32 %v647, 0.0
  %v752 = vmax.f32 %v648, 0.0
  %v753 = vmax.f32 %v649, 0.0
  %v754 = vmax.f32 %v650, 0.0
  %v755 = vmax.f32 %v651, 0.0
  %v756 = vmax.f32 %v652, 0.0
  %v757 = vmax.f32 %v653, 0.0
  %v758 = vmax.f32 %v654, 0.0
  %v759 = vmax.f32 %v655, 0.0
  %v760 = vmax.f32 %v656, 0.0
  %v761 = vmax.f32 %v657, 0.0
  %v762 = vmax.f32 %v658, 0.0
  %v763 = vmax.f32 %v659, 0.0
  %v764 = vmax.f32 %v660, 0.0
  %v765 = vmax.f32 %v661, 0.0
  %v766 = vmax.f32 %v662, 0.0
  %v767 = vmax.f32 %v663, 0.0
  %v768 = vmax.f32 %v664, 0.0
  %v769 = vmax.f32 %v665, 0.0
  %v770 = vmax.f32 %v666, 0.0
  %v771 = vmax.f32 %v667, 0.0
  %v772 = vmax.f32 %v668, 0.0
  %v773 = vmax.f32 %v669, 0.0
  %v774 = vmax.f32 %v670, 0.0
  %v775 = vmax.f32 %v671, 0.0
  %v776 = vmax.f32 %v672, 0.0
  %v777 = vmax.f32 %v673, 0.0
  %v778 = vmax.f32 %v674, 0.0
  %v779 = vmax.f32 %v675, 0.0
  %v780 = vmax.f32 %v676, 0.0
  %v781 = vmax.f32 %v677, 0.0
  %v782 = vmax.f32 %v678, 0.0
  %v783 = vmax.f32 %v679, 0.0
  %v784 = vmax.f32 %v680, 0.0
  %v785 = vmax.f32 %v681, 0.0
  %v786 = vmax.f32 %v682, 0.0
  %v787 = vmax.f32 %v683, 0.0
  %v788 = vmax.f32 %v684, 0.0
  %v789 = vmax.f32 %v685, 0.0
  %v790 = vmax.f32 %v686, 0.0
  %v791 = vmax.f32 %v687, 0.0
  %v792 = vmax.f32 %v688, 0.0
  %v793 = vmax.f32 %v689, 0.0
  %v794 = vmax.f32 %v690, 0.0
  %v795 = vmax.f32 %v691, 0.0
  %v796 = vmax.f32 %v692, 0.0
  %v797 = vmax.f32 %v693, 0.0
  %v798 = vmax.f32 %v694, 0.0
  %v799 = vmax.f32 %v695, 0.0
  %v800 = vmax.f32 %v696, 0.0
  %v801 = vmax.f32 %v697, 0.0
  %v802 = vmax.f32 %v698, 0.0
  %v803 = vmax.f32 %v699, 0.0
  %v804 = vmax.f32 %v700, 0.0
  %v805 = vmax.f32 %v701, 0.0
  %v806 = vmax.f32 %v702, 0.0
  %v807 = vmax.f32 %v703, %v707
  %v808 = vmax.f32 %v704, %v708
  %v809 = vmax.f32 %v705, %v709
  %v810 = vmax.f32 %v706, %v710
  %v811 = vmax.f32 %v711, %v715
  %v812 = vmax.f32 %v712, %v716
  %v813 = vmax.f32 %v713, %v717
  %v814 = vmax.f32 %v714, %v718
  %v815 = vmax.f32 %v719, %v723
  %v816 = vmax.f32 %v720, %v724
  %v817 = vmax.f32 %v721, %v725
  %v818 = vmax.f32 %v722, %v726
  %v819 = vmax.f32 %v727, %v731
  %v820 = vmax.f32 %v728, %v732
  %v821 = vmax.f32 %v729, %v733
  %v822 = vmax.f32 %v730, %v734
  %v823 = vmax.f32 %v735, %v739
  %v824 = vmax.f32 %v736, %v740
  %v825 = vmax.f32 %v737, %v741
  %v826 = vmax.f32 %v738, %v742
  %v827 = vmax.f32 %v743, %v747
  %v828 = vmax.f32 %v744, %v748
  %v829 = vmax.f32 %v745, %v749
  %v830 = vmax.f32 %v746, %v750
  %v831 = vmax.f32 %v751, %v755
  %v832 = vmax.f32 %v752, %v756
  %v833 = vmax.f32 %v753, %v757
  %v834 = vmax.f32 %v754, %v758
  %v835 = vmax.f32 %v759, %v763
  %v836 = vmax.f32 %v760, %v764
  %v837 = vmax.f32 %v761, %v765
  %v838 = vmax.f32 %v762, %v766
  %v839 = vmax.f32 %v767, %v771
  %v840 = vmax.f32 %v768, %v772
  %v841 = vmax.f32 %v769, %v773
  %v842 = vmax.f32 %v770, %v774
  %v843 = vmax.f32 %v775, %v779
  %v844 = vmax.f32 %v776, %v780
  %v845 = vmax.f32 %v777, %v781
  %v846 = vmax.f32 %v778, %v782
  %v847 = vmax.f32 %v783, %v787
  %v848 = vmax.f32 %v784, %v788
  %v849 = vmax.f32 %v785, %v789
  %v850 = vmax.f32 %v786, %v790
  %v851 = vmax.f32 %v791, %v795
  %v852 = vmax.f32 %v792, %v796
  %v853 = vmax.f32 %v793, %v797
  %v854 = vmax.f32 %v794, %v798
  %v855 = vmax.f32 %v799, %v803
  %v856 = vmax.f32 %v800, %v804
  %v857 = vmax.f32 %v801, %v805
  %v858 = vmax.f32 %v802, %v806
  %v859 = vld [vmem:[%s2] sm:$0xff]
  %v860 = vld [vmem:[%s2 + $0x8] sm:$0xff]
  %v861 = vld [vmem:[%s2 + $0x10] sm:$0xff]
  %v862 = vld [vmem:[%s2 + $0x18] sm:$0xff]
  %v863 = vld [vmem:[%s2 + $0x20] sm:$0xff]
  %v864 = vld [vmem:[%s2 + $0x28] sm:$0xff]
  %v865 = vld [vmem:[%s2 + $0x30] sm:$0xff]
  %v866 = vld [vmem:[%s2 + $0x38] sm:$0xff]
  %v867 = vld [vmem:[%s2 + $0x40] sm:$0xff]
  %v868 = vld [vmem:[%s2 + $0x48] sm:$0xff]
  %v869 = vld [vmem:[%s2 + $0x50] sm:$0xff]
  %v870 = vld [vmem:[%s2 + $0x58] sm:$0xff]
  %v871 = vld [vmem:[%s2 + $0x60] sm:$0xff]
  %v872 = vld [vmem:[%s2 + $0x68] sm:$0xff]
  %v873 = vld [vmem:[%s2 + $0x70] sm:$0xff]
  %v874 = vld [vmem:[%s2 + $0x78] sm:$0xff]
  %v875 = vld [vmem:[%s2 + $0x80] sm:$0xff]
  %v876 = vld [vmem:[%s2 + $0x88] sm:$0xff]
  %vm877 = vcmask 850944
  %v879 = vsel %vm877, %v859, 0
  %v882 = vsel %vm877, %v860, 0
  %v885 = vsel %vm877, %v861, 0
  %v888 = vsel %vm877, %v862, 0
  %v891 = vsel %vm877, %v863, 0
  %v894 = vsel %vm877, %v864, 0
  %v897 = vsel %vm877, %v865, 0
  %v900 = vsel %vm877, %v866, 0
  %v903 = vsel %vm877, %v867, 0
  %v906 = vsel %vm877, %v868, 0
  %v909 = vsel %vm877, %v869, 0
  %v912 = vsel %vm877, %v870, 0
  %v915 = vsel %vm877, %v871, 0
  %v918 = vsel %vm877, %v872, 0
  %v921 = vsel %vm877, %v873, 0
  %v924 = vsel %vm877, %v874, 0
  %v927 = vsel %vm877, %v875, 0
  %v930 = vsel %vm877, %v876, 0
  %932 = vmatprep.subr.mxu0 %v808
  %933 = vmatpush1.msra.mxu0 %v807
  %934 = vmatprep.subr.mxu0 %v812
  %935 = vmatpush1.msra.mxu0 %v811
  %936 = vmatprep.subr.mxu0 %v816
  %937 = vmatpush1.msra.mxu0 %v815
  %938 = vmatprep.subr.mxu0 %v820
  %939 = vmatpush1.msra.mxu0 %v819
  %940 = vmatprep.subr.mxu0 %v824
  %941 = vmatpush1.msra.mxu0 %v823
  %942 = vmatprep.subr.mxu0 %v828
  %943 = vmatpush1.msra.mxu0 %v827
  %944 = vmatprep.subr.mxu0 %v832
  %945 = vmatpush1.msra.mxu0 %v831
  %946 = vmatprep.subr.mxu0 %v836
  %947 = vmatpush1.msra.mxu0 %v835
  %948 = vmatprep.subr.mxu0 %v840
  %949 = vmatpush1.msra.mxu0 %v839
  %950 = vmatprep.subr.mxu0 %v844
  %951 = vmatpush1.msra.mxu0 %v843
  %952 = vmatprep.subr.mxu0 %v848
  %953 = vmatpush1.msra.mxu0 %v847
  %954 = vmatprep.subr.mxu0 %v852
  %955 = vmatpush1.msra.mxu0 %v851
  %956 = vmatprep.subr.mxu0 %v856
  %957 = vmatpush1.msra.mxu0 %v855
  %958 = vmatprep.subr.mxu0 0.0
  %959 = vmatpush1.msra.mxu0 0.0
  %960 = vmatprep.subr.mxu0 0.0
  %961 = vmatpush1.msra.mxu0 0.0
  %962 = vmatprep.subr.mxu0 0.0
  %963 = vmatpush1.msra.mxu0 0.0
  %964 = vmatprep.subr.mxu0 0.0
  %965 = vmatpush1.msra.mxu0 0.0
  %966 = vmatprep.subr.mxu0 0.0
  %967 = vmatpush1.msra.mxu0 0.0
  %968 = vmatprep.subr.mxu0 0.0
  %969 = vmatpush1.msra.mxu0 0.0
  %970 = vmatprep.subr.mxu0 0.0
  %971 = vmatpush1.msra.mxu0 0.0
  %972 = vmatprep.subr.mxu0 0.0
  %973 = vmatpush1.msra.mxu0 0.0
  %974 = vmatprep.subr.mxu0 0.0
  %975 = vmatpush1.msra.mxu0 0.0
  %976 = vmatprep.subr.mxu0 0.0
  %977 = vmatpush1.msra.mxu0 0.0
  %978 = vmatprep.subr.mxu0 0.0
  %979 = vmatpush1.msra.mxu0 0.0
  %980 = vmatprep.subr.mxu0 0.0
  %981 = vmatpush1.msra.mxu0 0.0
  %982 = vmatprep.subr.mxu0 0.0
  %983 = vmatpush1.msra.mxu0 0.0
  %984 = vmatprep.subr.mxu0 0.0
  %985 = vmatpush1.msra.mxu0 0.0
  %986 = vmatprep.subr.mxu0 0.0
  %987 = vmatpush1.msra.mxu0 0.0
  %988 = vmatprep.subr.mxu0 0.0
  %989 = vmatpush1.msra.mxu0 0.0
  %990 = vmatprep.subr.mxu0 0.0
  %991 = vmatpush1.msra.mxu0 0.0
  %992 = vmatprep.subr.mxu0 0.0
  %993 = vmatpush1.msra.mxu0 0.0
  %994 = vmatprep.subr.mxu0 0.0
  %995 = vmatpush1.msra.mxu0 0.0
  %996 = vmatprep.mubr.f32.mxu0 0.0
  %997 = vmatmul.mubr.f32.gmra.mrb[0].mxu0 %v879
  %v998 = vpop.f32.mrb[0].mxu0
  %v999 = vadd.f32 0.0, %v998
  %v1000 = vpop.f32.mrb[0].mxu0
  %v1001 = vadd.f32 0.0, %v1000
  %1002 = vmatprep.mubr.f32.mxu0 0.0
  %1003 = vmatmul.mubr.f32.gmra.mrb[0].mxu0 %v882
  %v1004 = vpop.f32.mrb[0].mxu0
  %v1005 = vadd.f32 0.0, %v1004
  %v1006 = vpop.f32.mrb[0].mxu0
  %v1007 = vadd.f32 0.0, %v1006
  %1008 = vmatprep.mubr.f32.mxu0 0.0
  %1009 = vmatmul.mubr.f32.gmra.mrb[0].mxu0 %v885
  %v1010 = vpop.f32.mrb[0].mxu0
  %v1011 = vadd.f32 0.0, %v1010
  %v1012 = vpop.f32.mrb[0].mxu0
  %v1013 = vadd.f32 0.0, %v1012
  %1014 = vmatprep.mubr.f32.mxu0 0.0
  %1015 = vmatmul.mubr.f32.gmra.mrb[0].mxu0 %v888
  %v1016 = vpop.f32.mrb[0].mxu0
  %v1017 = vadd.f32 0.0, %v1016
  %v1018 = vpop.f32.mrb[0].mxu0
  %v1019 = vadd.f32 0.0, %v1018
  %1020 = vmatprep.mubr.f32.mxu0 0.0
  %1021 = vmatmul.mubr.f32.gmra.mrb[0].mxu0 %v891
  %v1022 = vpop.f32.mrb[0].mxu0
  %v1023 = vadd.f32 0.0, %v1022
  %v1024 = vpop.f32.mrb[0].mxu0
  %v1025 = vadd.f32 0.0, %v1024
  %1026 = vmatprep.mubr.f32.mxu0 0.0
  %1027 = vmatmul.mubr.f32.gmra.mrb[0].mxu0 %v894
  %v1028 = vpop.f32.mrb[0].mxu0
  %v1029 = vadd.f32 0.0, %v1028
  %v1030 = vpop.f32.mrb[0].mxu0
  %v1031 = vadd.f32 0.0, %v1030
  %1032 = vmatprep.mubr.f32.mxu0 0.0
  %1033 = vmatmul.mubr.f32.gmra.mrb[0].mxu0 %v897
  %v1034 = vpop.f32.mrb[0].mxu0
  %v1035 = vadd.f32 0.0, %v1034
  %v1036 = vpop.f32.mrb[0].mxu0
  %v1037 = vadd.f32 0.0, %v1036
  %1038 = vmatprep.mubr.f32.mxu0 0.0
  %1039 = vmatmul.mubr.f32.gmra.mrb[0].mxu0 %v900
  %v1040 = vpop.f32.mrb[0].mxu0
  %v1041 = vadd.f32 0.0, %v1040
  %v1042 = vpop.f32.mrb[0].mxu0
  %v1043 = vadd.f32 0.0, %v1042
  %1044 = vmatprep.mubr.f32.mxu0 0.0
  %1045 = vmatmul.mubr.f32.gmra.mrb[0].mxu0 %v903
  %v1046 = vpop.f32.mrb[0].mxu0
  %v1047 = vadd.f32 0.0, %v1046
  %v1048 = vpop.f32.mrb[0].mxu0
  %v1049 = vadd.f32 0.0, %v1048
  %1050 = vmatprep.mubr.f32.mxu0 0.0
  %1051 = vmatmul.mubr.f32.gmra.mrb[0].mxu0 %v906
  %v1052 = vpop.f32.mrb[0].mxu0
  %v1053 = vadd.f32 0.0, %v1052
  %v1054 = vpop.f32.mrb[0].mxu0
  %v1055 = vadd.f32 0.0, %v1054
  %1056 = vmatprep.mubr.f32.mxu0 0.0
  %1057 = vmatmul.mubr.f32.gmra.mrb[0].mxu0 %v909
  %v1058 = vpop.f32.mrb[0].mxu0
  %v1059 = vadd.f32 0.0, %v1058
  %v1060 = vpop.f32.mrb[0].mxu0
  %v1061 = vadd.f32 0.0, %v1060
  %1062 = vmatprep.mubr.f32.mxu0 0.0
  %1063 = vmatmul.mubr.f32.gmra.mrb[0].mxu0 %v912
  %v1064 = vpop.f32.mrb[0].mxu0
  %v1065 = vadd.f32 0.0, %v1064
  %v1066 = vpop.f32.mrb[0].mxu0
  %v1067 = vadd.f32 0.0, %v1066
  %1068 = vmatprep.mubr.f32.mxu0 0.0
  %1069 = vmatmul.mubr.f32.gmra.mrb[0].mxu0 %v915
  %v1070 = vpop.f32.mrb[0].mxu0
  %v1071 = vadd.f32 0.0, %v1070
  %v1072 = vpop.f32.mrb[0].mxu0
  %v1073 = vadd.f32 0.0, %v1072
  %1074 = vmatprep.mubr.f32.mxu0 0.0
  %1075 = vmatmul.mubr.f32.gmra.mrb[0].mxu0 %v918
  %v1076 = vpop.f32.mrb[0].mxu0
  %v1077 = vadd.f32 0.0, %v1076
  %v1078 = vpop.f32.mrb[0].mxu0
  %v1079 = vadd.f32 0.0, %v1078
  %1080 = vmatprep.mubr.f32.mxu0 0.0
  %1081 = vmatmul.mubr.f32.gmra.mrb[0].mxu0 %v921
  %v1082 = vpop.f32.mrb[0].mxu0
  %v1083 = vadd.f32 0.0, %v1082
  %v1084 = vpop.f32.mrb[0].mxu0
  %v1085 = vadd.f32 0.0, %v1084
  %1086 = vmatprep.mubr.f32.mxu0 0.0
  %1087 = vmatmul.mubr.f32.gmra.mrb[0].mxu0 %v924
  %v1088 = vpop.f32.mrb[0].mxu0
  %v1089 = vadd.f32 0.0, %v1088
  %v1090 = vpop.f32.mrb[0].mxu0
  %v1091 = vadd.f32 0.0, %v1090
  %1092 = vmatprep.mubr.f32.mxu0 0.0
  %1093 = vmatmul.mubr.f32.gmra.mrb[0].mxu0 %v927
  %v1094 = vpop.f32.mrb[0].mxu0
  %v1095 = vpop.f32.mrb[0].mxu0
  %1096 = vmatprep.mubr.f32.mxu0 0.0
  %1097 = vmatmul.mubr.f32.gmra.mrb[0].mxu0 %v930
  %v1098 = vpop.f32.mrb[0].mxu0
  %v1099 = vpop.f32.mrb[0].mxu0
  %1100 = vdwg.mxu0
  %1101 = vmatprep.subr.mxu0 %v810
  %1102 = vmatpush1.msra.mxu0 %v809
  %1103 = vmatprep.subr.mxu0 %v814
  %1104 = vmatpush1.msra.mxu0 %v813
  %1105 = vmatprep.subr.mxu0 %v818
  %1106 = vmatpush1.msra.mxu0 %v817
  %1107 = vmatprep.subr.mxu0 %v822
  %1108 = vmatpush1.msra.mxu0 %v821
  %1109 = vmatprep.subr.mxu0 %v826
  %1110 = vmatpush1.msra.mxu0 %v825
  %1111 = vmatprep.subr.mxu0 %v830
  %1112 = vmatpush1.msra.mxu0 %v829
  %1113 = vmatprep.subr.mxu0 %v834
  %1114 = vmatpush1.msra.mxu0 %v833
  %1115 = vmatprep.subr.mxu0 %v838
  %1116 = vmatpush1.msra.mxu0 %v837
  %1117 = vmatprep.subr.mxu0 %v842
  %1118 = vmatpush1.msra.mxu0 %v841
  %1119 = vmatprep.subr.mxu0 %v846
  %1120 = vmatpush1.msra.mxu0 %v845
  %1121 = vmatprep.subr.mxu0 %v850
  %1122 = vmatpush1.msra.mxu0 %v849
  %1123 = vmatprep.subr.mxu0 %v854
  %1124 = vmatpush1.msra.mxu0 %v853
  %1125 = vmatprep.subr.mxu0 %v858
  %1126 = vmatpush1.msra.mxu0 %v857
  %1127 = vmatprep.subr.mxu0 0.0
  %1128 = vmatpush1.msra.mxu0 0.0
  %1129 = vmatprep.subr.mxu0 0.0
  %1130 = vmatpush1.msra.mxu0 0.0
  %1131 = vmatprep.subr.mxu0 0.0
  %1132 = vmatpush1.msra.mxu0 0.0
  %1133 = vmatprep.subr.mxu0 0.0
  %1134 = vmatpush1.msra.mxu0 0.0
  %1135 = vmatprep.subr.mxu0 0.0
  %1136 = vmatpush1.msra.mxu0 0.0
  %1137 = vmatprep.subr.mxu0 0.0
  %1138 = vmatpush1.msra.mxu0 0.0
  %1139 = vmatprep.subr.mxu0 0.0
  %1140 = vmatpush1.msra.mxu0 0.0
  %1141 = vmatprep.subr.mxu0 0.0
  %1142 = vmatpush1.msra.mxu0 0.0
  %1143 = vmatprep.subr.mxu0 0.0
  %1144 = vmatpush1.msra.mxu0 0.0
  %1145 = vmatprep.subr.mxu0 0.0
  %1146 = vmatpush1.msra.mxu0 0.0
  %1147 = vmatprep.subr.mxu0 0.0
  %1148 = vmatpush1.msra.mxu0 0.0
  %1149 = vmatprep.subr.mxu0 0.0
  %1150 = vmatpush1.msra.mxu0 0.0
  %1151 = vmatprep.subr.mxu0 0.0
  %1152 = vmatpush1.msra.mxu0 0.0
  %1153 = vmatprep.subr.mxu0 0.0
  %1154 = vmatpush1.msra.mxu0 0.0
  %1155 = vmatprep.subr.mxu0 0.0
  %1156 = vmatpush1.msra.mxu0 0.0
  %1157 = vmatprep.subr.mxu0 0.0
  %1158 = vmatpush1.msra.mxu0 0.0
  %1159 = vmatprep.subr.mxu0 0.0
  %1160 = vmatpush1.msra.mxu0 0.0
  %1161 = vmatprep.subr.mxu0 0.0
  %1162 = vmatpush1.msra.mxu0 0.0
  %1163 = vmatprep.subr.mxu0 0.0
  %1164 = vmatpush1.msra.mxu0 0.0
  %1165 = vmatprep.mubr.f32.mxu0 0.0
  %1166 = vmatmul.mubr.f32.gmra.mrb[0].mxu0 %v879
  %v1167 = vpop.f32.mrb[0].mxu0
  %v1168 = vadd.f32 0.0, %v1167
  %v1169 = vpop.f32.mrb[0].mxu0
  %v1170 = vadd.f32 0.0, %v1169
  %1171 = vmatprep.mubr.f32.mxu0 0.0
  %1172 = vmatmul.mubr.f32.gmra.mrb[0].mxu0 %v882
  %v1173 = vpop.f32.mrb[0].mxu0
  %v1174 = vadd.f32 0.0, %v1173
  %v1175 = vpop.f32.mrb[0].mxu0
  %v1176 = vadd.f32 0.0, %v1175
  %1177 = vmatprep.mubr.f32.mxu0 0.0
  %1178 = vmatmul.mubr.f32.gmra.mrb[0].mxu0 %v885
  %v1179 = vpop.f32.mrb[0].mxu0
  %v1180 = vadd.f32 0.0, %v1179
  %v1181 = vpop.f32.mrb[0].mxu0
  %v1182 = vadd.f32 0.0, %v1181
  %1183 = vmatprep.mubr.f32.mxu0 0.0
  %1184 = vmatmul.mubr.f32.gmra.mrb[0].mxu0 %v888
  %v1185 = vpop.f32.mrb[0].mxu0
  %v1186 = vadd.f32 0.0, %v1185
  %v1187 = vpop.f32.mrb[0].mxu0
  %v1188 = vadd.f32 0.0, %v1187
  %1189 = vmatprep.mubr.f32.mxu0 0.0
  %1190 = vmatmul.mubr.f32.gmra.mrb[0].mxu0 %v891
  %v1191 = vpop.f32.mrb[0].mxu0
  %v1192 = vadd.f32 0.0, %v1191
  %v1193 = vpop.f32.mrb[0].mxu0
  %v1194 = vadd.f32 0.0, %v1193
  %1195 = vmatprep.mubr.f32.mxu0 0.0
  %1196 = vmatmul.mubr.f32.gmra.mrb[0].mxu0 %v894
  %v1197 = vpop.f32.mrb[0].mxu0
  %v1198 = vadd.f32 0.0, %v1197
  %v1199 = vpop.f32.mrb[0].mxu0
  %v1200 = vadd.f32 0.0, %v1199
  %1201 = vmatprep.mubr.f32.mxu0 0.0
  %1202 = vmatmul.mubr.f32.gmra.mrb[0].mxu0 %v897
  %v1203 = vpop.f32.mrb[0].mxu0
  %v1204 = vadd.f32 0.0, %v1203
  %v1205 = vpop.f32.mrb[0].mxu0
  %v1206 = vadd.f32 0.0, %v1205
  %1207 = vmatprep.mubr.f32.mxu0 0.0
  %1208 = vmatmul.mubr.f32.gmra.mrb[0].mxu0 %v900
  %v1209 = vpop.f32.mrb[0].mxu0
  %v1210 = vadd.f32 0.0, %v1209
  %v1211 = vpop.f32.mrb[0].mxu0
  %v1212 = vadd.f32 0.0, %v1211
  %1213 = vmatprep.mubr.f32.mxu0 0.0
  %1214 = vmatmul.mubr.f32.gmra.mrb[0].mxu0 %v903
  %v1215 = vpop.f32.mrb[0].mxu0
  %v1216 = vadd.f32 0.0, %v1215
  %v1217 = vpop.f32.mrb[0].mxu0
  %v1218 = vadd.f32 0.0, %v1217
  %1219 = vmatprep.mubr.f32.mxu0 0.0
  %1220 = vmatmul.mubr.f32.gmra.mrb[0].mxu0 %v906
  %v1221 = vpop.f32.mrb[0].mxu0
  %v1222 = vadd.f32 0.0, %v1221
  %v1223 = vpop.f32.mrb[0].mxu0
  %v1224 = vadd.f32 0.0, %v1223
  %1225 = vmatprep.mubr.f32.mxu0 0.0
  %1226 = vmatmul.mubr.f32.gmra.mrb[0].mxu0 %v909
  %v1227 = vpop.f32.mrb[0].mxu0
  %v1228 = vadd.f32 0.0, %v1227
  %v1229 = vpop.f32.mrb[0].mxu0
  %v1230 = vadd.f32 0.0, %v1229
  %1231 = vmatprep.mubr.f32.mxu0 0.0
  %1232 = vmatmul.mubr.f32.gmra.mrb[0].mxu0 %v912
  %v1233 = vpop.f32.mrb[0].mxu0
  %v1234 = vadd.f32 0.0, %v1233
  %v1235 = vpop.f32.mrb[0].mxu0
  %v1236 = vadd.f32 0.0, %v1235
  %1237 = vmatprep.mubr.f32.mxu0 0.0
  %1238 = vmatmul.mubr.f32.gmra.mrb[0].mxu0 %v915
  %v1239 = vpop.f32.mrb[0].mxu0
  %v1240 = vadd.f32 0.0, %v1239
  %v1241 = vpop.f32.mrb[0].mxu0
  %v1242 = vadd.f32 0.0, %v1241
  %1243 = vmatprep.mubr.f32.mxu0 0.0
  %1244 = vmatmul.mubr.f32.gmra.mrb[0].mxu0 %v918
  %v1245 = vpop.f32.mrb[0].mxu0
  %v1246 = vadd.f32 0.0, %v1245
  %v1247 = vpop.f32.mrb[0].mxu0
  %v1248 = vadd.f32 0.0, %v1247
  %1249 = vmatprep.mubr.f32.mxu0 0.0
  %1250 = vmatmul.mubr.f32.gmra.mrb[0].mxu0 %v921
  %v1251 = vpop.f32.mrb[0].mxu0
  %v1252 = vadd.f32 0.0, %v1251
  %v1253 = vpop.f32.mrb[0].mxu0
  %v1254 = vadd.f32 0.0, %v1253
  %1255 = vmatprep.mubr.f32.mxu0 0.0
  %1256 = vmatmul.mubr.f32.gmra.mrb[0].mxu0 %v924
  %v1257 = vpop.f32.mrb[0].mxu0
  %v1258 = vadd.f32 0.0, %v1257
  %v1259 = vpop.f32.mrb[0].mxu0
  %v1260 = vadd.f32 0.0, %v1259
  %1261 = vmatprep.mubr.f32.mxu0 0.0
  %1262 = vmatmul.mubr.f32.gmra.mrb[0].mxu0 %v927
  %v1263 = vpop.f32.mrb[0].mxu0
  %v1264 = vpop.f32.mrb[0].mxu0
  %1265 = vmatprep.mubr.f32.mxu0 0.0
  %1266 = vmatmul.mubr.f32.gmra.mrb[0].mxu0 %v930
  %v1267 = vpop.f32.mrb[0].mxu0
  %v1268 = vpop.f32.mrb[0].mxu0
  %1269 = vdwg.mxu0
  %v1270 = vadd.f32 %v999, %v27
  %v1271 = vadd.f32 %v1001, %v28
  %v1272 = vadd.f32 %v1168, %v29
  %v1273 = vadd.f32 %v1170, %v30
  %v1274 = vadd.f32 %v1005, %v31
  %v1275 = vadd.f32 %v1007, %v32
  %v1276 = vadd.f32 %v1174, %v33
  %v1277 = vadd.f32 %v1176, %v34
  %v1278 = vadd.f32 %v1011, %v27
  %v1279 = vadd.f32 %v1013, %v28
  %v1280 = vadd.f32 %v1180, %v29
  %v1281 = vadd.f32 %v1182, %v30
  %v1282 = vadd.f32 %v1017, %v31
  %v1283 = vadd.f32 %v1019, %v32
  %v1284 = vadd.f32 %v1186, %v33
  %v1285 = vadd.f32 %v1188, %v34
  %v1286 = vadd.f32 %v1023, %v27
  %v1287 = vadd.f32 %v1025, %v28
  %v1288 = vadd.f32 %v1192, %v29
  %v1289 = vadd.f32 %v1194, %v30
  %v1290 = vadd.f32 %v1029, %v31
  %v1291 = vadd.f32 %v1031, %v32
  %v1292 = vadd.f32 %v1198, %v33
  %v1293 = vadd.f32 %v1200, %v34
  %v1294 = vadd.f32 %v1035, %v27
  %v1295 = vadd.f32 %v1037, %v28
  %v1296 = vadd.f32 %v1204, %v29
  %v1297 = vadd.f32 %v1206, %v30
  %v1298 = vadd.f32 %v1041, %v31
  %v1299 = vadd.f32 %v1043, %v32
  %v1300 = vadd.f32 %v1210, %v33
  %v1301 = vadd.f32 %v1212, %v34
  %v1302 = vadd.f32 %v1047, %v27
  %v1303 = vadd.f32 %v1049, %v28
  %v1304 = vadd.f32 %v1216, %v29
  %v1305 = vadd.f32 %v1218, %v30
  %v1306 = vadd.f32 %v1053, %v31
  %v1307 = vadd.f32 %v1055, %v32
  %v1308 = vadd.f32 %v1222, %v33
  %v1309 = vadd.f32 %v1224, %v34
  %v1310 = vadd.f32 %v1059, %v27
  %v1311 = vadd.f32 %v1061, %v28
  %v1312 = vadd.f32 %v1228, %v29
  %v1313 = vadd.f32 %v1230, %v30
  %v1314 = vadd.f32 %v1065, %v31
  %v1315 = vadd.f32 %v1067, %v32
  %v1316 = vadd.f32 %v1234, %v33
  %v1317 = vadd.f32 %v1236, %v34
  %v1318 = vadd.f32 %v1071, %v27
  %v1319 = vadd.f32 %v1073, %v28
  %v1320 = vadd.f32 %v1240, %v29
  %v1321 = vadd.f32 %v1242, %v30
  %v1322 = vadd.f32 %v1077, %v31
  %v1323 = vadd.f32 %v1079, %v32
  %v1324 = vadd.f32 %v1246, %v33
  %v1325 = vadd.f32 %v1248, %v34
  %v1326 = vadd.f32 %v1083, %v27
  %v1327 = vadd.f32 %v1085, %v28
  %v1328 = vadd.f32 %v1252, %v29
  %v1329 = vadd.f32 %v1254, %v30
  %v1330 = vadd.f32 %v1089, %v31
  %v1331 = vadd.f32 %v1091, %v32
  %v1332 = vadd.f32 %v1258, %v33
  %v1333 = vadd.f32 %v1260, %v34
  %v1334 = vmax.f32 %v1270, 0.0
  %v1335 = vmax.f32 %v1271, 0.0
  %v1336 = vmax.f32 %v1272, 0.0
  %v1337 = vmax.f32 %v1273, 0.0
  %v1338 = vmax.f32 %v1274, 0.0
  %v1339 = vmax.f32 %v1275, 0.0
  %v1340 = vmax.f32 %v1276, 0.0
  %v1341 = vmax.f32 %v1277, 0.0
  %v1342 = vmax.f32 %v1278, 0.0
  %v1343 = vmax.f32 %v1279, 0.0
  %v1344 = vmax.f32 %v1280, 0.0
  %v1345 = vmax.f32 %v1281, 0.0
  %v1346 = vmax.f32 %v1282, 0.0
  %v1347 = vmax.f32 %v1283, 0.0
  %v1348 = vmax.f32 %v1284, 0.0
  %v1349 = vmax.f32 %v1285, 0.0
  %v1350 = vmax.f32 %v1286, 0.0
  %v1351 = vmax.f32 %v1287, 0.0
  %v1352 = vmax.f32 %v1288, 0.0
  %v1353 = vmax.f32 %v1289, 0.0
  %v1354 = vmax.f32 %v1290, 0.0
  %v1355 = vmax.f32 %v1291, 0.0
  %v1356 = vmax.f32 %v1292, 0.0
  %v1357 = vmax.f32 %v1293, 0.0
  %v1358 = vmax.f32 %v1294, 0.0
  %v1359 = vmax.f32 %v1295, 0.0
  %v1360 = vmax.f32 %v1296, 0.0
  %v1361 = vmax.f32 %v1297, 0.0
  %v1362 = vmax.f32 %v1298, 0.0
  %v1363 = vmax.f32 %v1299, 0.0
  %v1364 = vmax.f32 %v1300, 0.0
  %v1365 = vmax.f32 %v1301, 0.0
  %v1366 = vmax.f32 %v1302, 0.0
  %v1367 = vmax.f32 %v1303, 0.0
  %v1368 = vmax.f32 %v1304, 0.0
  %v1369 = vmax.f32 %v1305, 0.0
  %v1370 = vmax.f32 %v1306, 0.0
  %v1371 = vmax.f32 %v1307, 0.0
  %v1372 = vmax.f32 %v1308, 0.0
  %v1373 = vmax.f32 %v1309, 0.0
  %v1374 = vmax.f32 %v1310, 0.0
  %v1375 = vmax.f32 %v1311, 0.0
  %v1376 = vmax.f32 %v1312, 0.0
  %v1377 = vmax.f32 %v1313, 0.0
  %v1378 = vmax.f32 %v1314, 0.0
  %v1379 = vmax.f32 %v1315, 0.0
  %v1380 = vmax.f32 %v1316, 0.0
  %v1381 = vmax.f32 %v1317, 0.0
  %v1382 = vmax.f32 %v1318, 0.0
  %v1383 = vmax.f32 %v1319, 0.0
  %v1384 = vmax.f32 %v1320, 0.0
  %v1385 = vmax.f32 %v1321, 0.0
  %v1386 = vmax.f32 %v1322, 0.0
  %v1387 = vmax.f32 %v1323, 0.0
  %v1388 = vmax.f32 %v1324, 0.0
  %v1389 = vmax.f32 %v1325, 0.0
  %v1390 = vmax.f32 %v1326, 0.0
  %v1391 = vmax.f32 %v1327, 0.0
  %v1392 = vmax.f32 %v1328, 0.0
  %v1393 = vmax.f32 %v1329, 0.0
  %v1394 = vmax.f32 %v1330, 0.0
  %v1395 = vmax.f32 %v1331, 0.0
  %v1396 = vmax.f32 %v1332, 0.0
  %v1397 = vmax.f32 %v1333, 0.0
  %v1398 = vmax.f32 %v1334, %v1342
  %v1399 = vmax.f32 %v1335, %v1343
  %v1400 = vmax.f32 %v1336, %v1344
  %v1401 = vmax.f32 %v1337, %v1345
  %v1402 = vmax.f32 %v1338, %v1346
  %v1403 = vmax.f32 %v1339, %v1347
  %v1404 = vmax.f32 %v1340, %v1348
  %v1405 = vmax.f32 %v1341, %v1349
  %v1406 = vmax.f32 %v1350, %v1358
  %v1407 = vmax.f32 %v1351, %v1359
  %v1408 = vmax.f32 %v1352, %v1360
  %v1409 = vmax.f32 %v1353, %v1361
  %v1410 = vmax.f32 %v1354, %v1362
  %v1411 = vmax.f32 %v1355, %v1363
  %v1412 = vmax.f32 %v1356, %v1364
  %v1413 = vmax.f32 %v1357, %v1365
  %v1414 = vmax.f32 %v1366, %v1374
  %v1415 = vmax.f32 %v1367, %v1375
  %v1416 = vmax.f32 %v1368, %v1376
  %v1417 = vmax.f32 %v1369, %v1377
  %v1418 = vmax.f32 %v1370, %v1378
  %v1419 = vmax.f32 %v1371, %v1379
  %v1420 = vmax.f32 %v1372, %v1380
  %v1421 = vmax.f32 %v1373, %v1381
  %v1422 = vmax.f32 %v1382, %v1390
  %v1423 = vmax.f32 %v1383, %v1391
  %v1424 = vmax.f32 %v1384, %v1392
  %v1425 = vmax.f32 %v1385, %v1393
  %v1426 = vmax.f32 %v1386, %v1394
  %v1427 = vmax.f32 %v1387, %v1395
  %v1428 = vmax.f32 %v1388, %v1396
  %v1429 = vmax.f32 %v1389, %v1397
  %v1430 = vld [vmem:[%s3] sm:$0xff]
  %v1431 = vld [vmem:[%s3 + $0x8] sm:$0xff]
  %v1432 = vld [vmem:[%s3 + $0x10] sm:$0xff]
  %v1433 = vld [vmem:[%s3 + $0x18] sm:$0xff]
  %v1434 = vld [vmem:[%s3 + $0x20] sm:$0xff]
  %v1435 = vld [vmem:[%s3 + $0x28] sm:$0xff]
  %v1436 = vld [vmem:[%s3 + $0x30] sm:$0xff]
  %v1437 = vld [vmem:[%s3 + $0x38] sm:$0xff]
  %vm1438 = vcmask 523264
  %v1440 = vsel %vm1438, %v1430, 0
  %v1443 = vsel %vm1438, %v1431, 0
  %v1446 = vsel %vm1438, %v1432, 0
  %v1449 = vsel %vm1438, %v1433, 0
  %v1452 = vsel %vm1438, %v1434, 0
  %v1455 = vsel %vm1438, %v1435, 0
  %v1458 = vsel %vm1438, %v1436, 0
  %v1461 = vsel %vm1438, %v1437, 0
  %1463 = vmatprep.subr.mxu0 %v1399
  %1464 = vmatpush1.msra.mxu0 %v1398
  %1465 = vmatprep.subr.mxu0 %v1403
  %1466 = vmatpush1.msra.mxu0 %v1402
  %1467 = vmatprep.subr.mxu0 %v1407
  %1468 = vmatpush1.msra.mxu0 %v1406
  %1469 = vmatprep.subr.mxu0 %v1411
  %1470 = vmatpush1.msra.mxu0 %v1410
  %1471 = vmatprep.subr.mxu0 %v1415
  %1472 = vmatpush1.msra.mxu0 %v1414
  %1473 = vmatprep.subr.mxu0 %v1419
  %1474 = vmatpush1.msra.mxu0 %v1418
  %1475 = vmatprep.subr.mxu0 %v1423
  %1476 = vmatpush1.msra.mxu0 %v1422
  %1477 = vmatprep.subr.mxu0 %v1427
  %1478 = vmatpush1.msra.mxu0 %v1426
  %1479 = vmatprep.subr.mxu0 0.0
  %1480 = vmatpush1.msra.mxu0 0.0
  %1481 = vmatprep.subr.mxu0 0.0
  %1482 = vmatpush1.msra.mxu0 0.0
  %1483 = vmatprep.subr.mxu0 0.0
  %1484 = vmatpush1.msra.mxu0 0.0
  %1485 = vmatprep.subr.mxu0 0.0
  %1486 = vmatpush1.msra.mxu0 0.0
  %1487 = vmatprep.subr.mxu0 0.0
  %1488 = vmatpush1.msra.mxu0 0.0
  %1489 = vmatprep.subr.mxu0 0.0
  %1490 = vmatpush1.msra.mxu0 0.0
  %1491 = vmatprep.subr.mxu0 0.0
  %1492 = vmatpush1.msra.mxu0 0.0
  %1493 = vmatprep.subr.mxu0 0.0
  %1494 = vmatpush1.msra.mxu0 0.0
  %1495 = vmatprep.subr.mxu0 0.0
  %1496 = vmatpush1.msra.mxu0 0.0
  %1497 = vmatprep.subr.mxu0 0.0
  %1498 = vmatpush1.msra.mxu0 0.0
  %1499 = vmatprep.subr.mxu0 0.0
  %1500 = vmatpush1.msra.mxu0 0.0
  %1501 = vmatprep.subr.mxu0 0.0
  %1502 = vmatpush1.msra.mxu0 0.0
  %1503 = vmatprep.subr.mxu0 0.0
  %1504 = vmatpush1.msra.mxu0 0.0
  %1505 = vmatprep.subr.mxu0 0.0
  %1506 = vmatpush1.msra.mxu0 0.0
  %1507 = vmatprep.subr.mxu0 0.0
  %1508 = vmatpush1.msra.mxu0 0.0
  %1509 = vmatprep.subr.mxu0 0.0
  %1510 = vmatpush1.msra.mxu0 0.0
  %1511 = vmatprep.subr.mxu0 0.0
  %1512 = vmatpush1.msra.mxu0 0.0
  %1513 = vmatprep.subr.mxu0 0.0
  %1514 = vmatpush1.msra.mxu0 0.0
  %1515 = vmatprep.subr.mxu0 0.0
  %1516 = vmatpush1.msra.mxu0 0.0
  %1517 = vmatprep.subr.mxu0 0.0
  %1518 = vmatpush1.msra.mxu0 0.0
  %1519 = vmatprep.subr.mxu0 0.0
  %1520 = vmatpush1.msra.mxu0 0.0
  %1521 = vmatprep.subr.mxu0 0.0
  %1522 = vmatpush1.msra.mxu0 0.0
  %1523 = vmatprep.subr.mxu0 0.0
  %1524 = vmatpush1.msra.mxu0 0.0
  %1525 = vmatprep.subr.mxu0 0.0
  %1526 = vmatpush1.msra.mxu0 0.0
  %1527 = vmatprep.mubr.f32.mxu0 0.0
  %1528 = vmatmul.mubr.f32.gmra.mrb[0].mxu0 %v1440
  %v1529 = vpop.f32.mrb[0].mxu0
  %v1530 = vadd.f32 0.0, %v1529
  %v1531 = vpop.f32.mrb[0].mxu0
  %v1532 = vadd.f32 0.0, %v1531
  %1533 = vmatprep.mubr.f32.mxu0 0.0
  %1534 = vmatmul.mubr.f32.gmra.mrb[0].mxu0 %v1443
  %v1535 = vpop.f32.mrb[0].mxu0
  %v1536 = vadd.f32 0.0, %v1535
  %v1537 = vpop.f32.mrb[0].mxu0
  %v1538 = vadd.f32 0.0, %v1537
  %1539 = vmatprep.mubr.f32.mxu0 0.0
  %1540 = vmatmul.mubr.f32.gmra.mrb[0].mxu0 %v1446
  %v1541 = vpop.f32.mrb[0].mxu0
  %v1542 = vadd.f32 0.0, %v1541
  %v1543 = vpop.f32.mrb[0].mxu0
  %v1544 = vadd.f32 0.0, %v1543
  %1545 = vmatprep.mubr.f32.mxu0 0.0
  %1546 = vmatmul.mubr.f32.gmra.mrb[0].mxu0 %v1449
  %v1547 = vpop.f32.mrb[0].mxu0
  %v1548 = vadd.f32 0.0, %v1547
  %v1549 = vpop.f32.mrb[0].mxu0
  %v1550 = vadd.f32 0.0, %v1549
  %1551 = vmatprep.mubr.f32.mxu0 0.0
  %1552 = vmatmul.mubr.f32.gmra.mrb[0].mxu0 %v1452
  %v1553 = vpop.f32.mrb[0].mxu0
  %v1554 = vadd.f32 0.0, %v1553
  %v1555 = vpop.f32.mrb[0].mxu0
  %v1556 = vadd.f32 0.0, %v1555
  %1557 = vmatprep.mubr.f32.mxu0 0.0
  %1558 = vmatmul.mubr.f32.gmra.mrb[0].mxu0 %v1455
  %v1559 = vpop.f32.mrb[0].mxu0
  %v1560 = vadd.f32 0.0, %v1559
  %v1561 = vpop.f32.mrb[0].mxu0
  %v1562 = vadd.f32 0.0, %v1561
  %1563 = vmatprep.mubr.f32.mxu0 0.0
  %1564 = vmatmul.mubr.f32.gmra.mrb[0].mxu0 %v1458
  %v1565 = vpop.f32.mrb[0].mxu0
  %v1566 = vadd.f32 0.0, %v1565
  %v1567 = vpop.f32.mrb[0].mxu0
  %v1568 = vadd.f32 0.0, %v1567
  %1569 = vmatprep.mubr.f32.mxu0 0.0
  %1570 = vmatmul.mubr.f32.gmra.mrb[0].mxu0 %v1461
  %v1571 = vpop.f32.mrb[0].mxu0
  %v1572 = vadd.f32 0.0, %v1571
  %v1573 = vpop.f32.mrb[0].mxu0
  %v1574 = vadd.f32 0.0, %v1573
  %1575 = vdwg.mxu0
  %1576 = vmatprep.subr.mxu0 %v1401
  %1577 = vmatpush1.msra.mxu0 %v1400
  %1578 = vmatprep.subr.mxu0 %v1405
  %1579 = vmatpush1.msra.mxu0 %v1404
  %1580 = vmatprep.subr.mxu0 %v1409
  %1581 = vmatpush1.msra.mxu0 %v1408
  %1582 = vmatprep.subr.mxu0 %v1413
  %1583 = vmatpush1.msra.mxu0 %v1412
  %1584 = vmatprep.subr.mxu0 %v1417
  %1585 = vmatpush1.msra.mxu0 %v1416
  %1586 = vmatprep.subr.mxu0 %v1421
  %1587 = vmatpush1.msra.mxu0 %v1420
  %1588 = vmatprep.subr.mxu0 %v1425
  %1589 = vmatpush1.msra.mxu0 %v1424
  %1590 = vmatprep.subr.mxu0 %v1429
  %1591 = vmatpush1.msra.mxu0 %v1428
  %1592 = vmatprep.subr.mxu0 0.0
  %1593 = vmatpush1.msra.mxu0 0.0
  %1594 = vmatprep.subr.mxu0 0.0
  %1595 = vmatpush1.msra.mxu0 0.0
  %1596 = vmatprep.subr.mxu0 0.0
  %1597 = vmatpush1.msra.mxu0 0.0
  %1598 = vmatprep.subr.mxu0 0.0
  %1599 = vmatpush1.msra.mxu0 0.0
  %1600 = vmatprep.subr.mxu0 0.0
  %1601 = vmatpush1.msra.mxu0 0.0
  %1602 = vmatprep.subr.mxu0 0.0
  %1603 = vmatpush1.msra.mxu0 0.0
  %1604 = vmatprep.subr.mxu0 0.0
  %1605 = vmatpush1.msra.mxu0 0.0
  %1606 = vmatprep.subr.mxu0 0.0
  %1607 = vmatpush1.msra.mxu0 0.0
  %1608 = vmatprep.subr.mxu0 0.0
  %1609 = vmatpush1.msra.mxu0 0.0
  %1610 = vmatprep.subr.mxu0 0.0
  %1611 = vmatpush1.msra.mxu0 0.0
  %1612 = vmatprep.subr.mxu0 0.0
  %1613 = vmatpush1.msra.mxu0 0.0
  %1614 = vmatprep.subr.mxu0 0.0
  %1615 = vmatpush1.msra.mxu0 0.0
  %1616 = vmatprep.subr.mxu0 0.0
  %1617 = vmatpush1.msra.mxu0 0.0
  %1618 = vmatprep.subr.mxu0 0.0
  %1619 = vmatpush1.msra.mxu0 0.0
  %1620 = vmatprep.subr.mxu0 0.0
  %1621 = vmatpush1.msra.mxu0 0.0
  %1622 = vmatprep.subr.mxu0 0.0
  %1623 = vmatpush1.msra.mxu0 0.0
  %1624 = vmatprep.subr.mxu0 0.0
  %1625 = vmatpush1.msra.mxu0 0.0
  %1626 = vmatprep.subr.mxu0 0.0
  %1627 = vmatpush1.msra.mxu0 0.0
  %1628 = vmatprep.subr.mxu0 0.0
  %1629 = vmatpush1.msra.mxu0 0.0
  %1630 = vmatprep.subr.mxu0 0.0
  %1631 = vmatpush1.msra.mxu0 0.0
  %1632 = vmatprep.subr.mxu0 0.0
  %1633 = vmatpush1.msra.mxu0 0.0
  %1634 = vmatprep.subr.mxu0 0.0
  %1635 = vmatpush1.msra.mxu0 0.0
  %1636 = vmatprep.subr.mxu0 0.0
  %1637 = vmatpush1.msra.mxu0 0.0
  %1638 = vmatprep.subr.mxu0 0.0
  %1639 = vmatpush1.msra.mxu0 0.0
  %1640 = vmatprep.mubr.f32.mxu0 0.0
  %1641 = vmatmul.mubr.f32.gmra.mrb[0].mxu0 %v1440
  %v1642 = vpop.f32.mrb[0].mxu0
  %v1643 = vadd.f32 0.0, %v1642
  %v1644 = vpop.f32.mrb[0].mxu0
  %v1645 = vadd.f32 0.0, %v1644
  %1646 = vmatprep.mubr.f32.mxu0 0.0
  %1647 = vmatmul.mubr.f32.gmra.mrb[0].mxu0 %v1443
  %v1648 = vpop.f32.mrb[0].mxu0
  %v1649 = vadd.f32 0.0, %v1648
  %v1650 = vpop.f32.mrb[0].mxu0
  %v1651 = vadd.f32 0.0, %v1650
  %1652 = vmatprep.mubr.f32.mxu0 0.0
  %1653 = vmatmul.mubr.f32.gmra.mrb[0].mxu0 %v1446
  %v1654 = vpop.f32.mrb[0].mxu0
  %v1655 = vadd.f32 0.0, %v1654
  %v1656 = vpop.f32.mrb[0].mxu0
  %v1657 = vadd.f32 0.0, %v1656
  %1658 = vmatprep.mubr.f32.mxu0 0.0
  %1659 = vmatmul.mubr.f32.gmra.mrb[0].mxu0 %v1449
  %v1660 = vpop.f32.mrb[0].mxu0
  %v1661 = vadd.f32 0.0, %v1660
  %v1662 = vpop.f32.mrb[0].mxu0
  %v1663 = vadd.f32 0.0, %v1662
  %1664 = vmatprep.mubr.f32.mxu0 0.0
  %1665 = vmatmul.mubr.f32.gmra.mrb[0].mxu0 %v1452
  %v1666 = vpop.f32.mrb[0].mxu0
  %v1667 = vadd.f32 0.0, %v1666
  %v1668 = vpop.f32.mrb[0].mxu0
  %v1669 = vadd.f32 0.0, %v1668
  %1670 = vmatprep.mubr.f32.mxu0 0.0
  %1671 = vmatmul.mubr.f32.gmra.mrb[0].mxu0 %v1455
  %v1672 = vpop.f32.mrb[0].mxu0
  %v1673 = vadd.f32 0.0, %v1672
  %v1674 = vpop.f32.mrb[0].mxu0
  %v1675 = vadd.f32 0.0, %v1674
  %1676 = vmatprep.mubr.f32.mxu0 0.0
  %1677 = vmatmul.mubr.f32.gmra.mrb[0].mxu0 %v1458
  %v1678 = vpop.f32.mrb[0].mxu0
  %v1679 = vadd.f32 0.0, %v1678
  %v1680 = vpop.f32.mrb[0].mxu0
  %v1681 = vadd.f32 0.0, %v1680
  %1682 = vmatprep.mubr.f32.mxu0 0.0
  %1683 = vmatmul.mubr.f32.gmra.mrb[0].mxu0 %v1461
  %v1684 = vpop.f32.mrb[0].mxu0
  %v1685 = vadd.f32 0.0, %v1684
  %v1686 = vpop.f32.mrb[0].mxu0
  %v1687 = vadd.f32 0.0, %v1686
  %1688 = vdwg.mxu0
  %v1689 = vadd.f32 %v1530, %v35
  %v1690 = vadd.f32 %v1532, %v36
  %v1691 = vadd.f32 %v1643, %v37
  %v1692 = vadd.f32 %v1645, %v38
  %v1693 = vadd.f32 %v1536, %v39
  %v1694 = vadd.f32 %v1538, %v40
  %v1695 = vadd.f32 %v1649, %v41
  %v1696 = vadd.f32 %v1651, %v42
  %v1697 = vadd.f32 %v1542, %v43
  %v1698 = vadd.f32 %v1544, %v44
  %v1699 = vadd.f32 %v1655, %v45
  %v1700 = vadd.f32 %v1657, %v46
  %v1701 = vadd.f32 %v1548, %v47
  %v1702 = vadd.f32 %v1550, %v48
  %v1703 = vadd.f32 %v1661, %v49
  %v1704 = vadd.f32 %v1663, %v50
  %v1705 = vadd.f32 %v1554, %v35
  %v1706 = vadd.f32 %v1556, %v36
  %v1707 = vadd.f32 %v1667, %v37
  %v1708 = vadd.f32 %v1669, %v38
  %v1709 = vadd.f32 %v1560, %v39
  %v1710 = vadd.f32 %v1562, %v40
  %v1711 = vadd.f32 %v1673, %v41
  %v1712 = vadd.f32 %v1675, %v42
  %v1713 = vadd.f32 %v1566, %v43
  %v1714 = vadd.f32 %v1568, %v44
  %v1715 = vadd.f32 %v1679, %v45
  %v1716 = vadd.f32 %v1681, %v46
  %v1717 = vadd.f32 %v1572, %v47
  %v1718 = vadd.f32 %v1574, %v48
  %v1719 = vadd.f32 %v1685, %v49
  %v1720 = vadd.f32 %v1687, %v50
  %v1721 = vmax.f32 %v1689, 0.0
  %v1722 = vmax.f32 %v1690, 0.0
  %v1723 = vmax.f32 %v1691, 0.0
  %v1724 = vmax.f32 %v1692, 0.0
  %v1725 = vmax.f32 %v1693, 0.0
  %v1726 = vmax.f32 %v1694, 0.0
  %v1727 = vmax.f32 %v1695, 0.0
  %v1728 = vmax.f32 %v1696, 0.0
  %v1729 = vmax.f32 %v1697, 0.0
  %v1730 = vmax.f32 %v1698, 0.0
  %v1731 = vmax.f32 %v1699, 0.0
  %v1732 = vmax.f32 %v1700, 0.0
  %v1733 = vmax.f32 %v1701, 0.0
  %v1734 = vmax.f32 %v1702, 0.0
  %v1735 = vmax.f32 %v1703, 0.0
  %v1736 = vmax.f32 %v1704, 0.0
  %v1737 = vmax.f32 %v1705, 0.0
  %v1738 = vmax.f32 %v1706, 0.0
  %v1739 = vmax.f32 %v1707, 0.0
  %v1740 = vmax.f32 %v1708, 0.0
  %v1741 = vmax.f32 %v1709, 0.0
  %v1742 = vmax.f32 %v1710, 0.0
  %v1743 = vmax.f32 %v1711, 0.0
  %v1744 = vmax.f32 %v1712, 0.0
  %v1745 = vmax.f32 %v1713, 0.0
  %v1746 = vmax.f32 %v1714, 0.0
  %v1747 = vmax.f32 %v1715, 0.0
  %v1748 = vmax.f32 %v1716, 0.0
  %v1749 = vmax.f32 %v1717, 0.0
  %v1750 = vmax.f32 %v1718, 0.0
  %v1751 = vmax.f32 %v1719, 0.0
  %v1752 = vmax.f32 %v1720, 0.0
  %v1753 = vmax.f32 %v1721, %v1737
  %v1754 = vmax.f32 %v1722, %v1738
  %v1755 = vmax.f32 %v1723, %v1739
  %v1756 = vmax.f32 %v1724, %v1740
  %v1757 = vmax.f32 %v1725, %v1741
  %v1758 = vmax.f32 %v1726, %v1742
  %v1759 = vmax.f32 %v1727, %v1743
  %v1760 = vmax.f32 %v1728, %v1744
  %v1761 = vmax.f32 %v1729, %v1745
  %v1762 = vmax.f32 %v1730, %v1746
  %v1763 = vmax.f32 %v1731, %v1747
  %v1764 = vmax.f32 %v1732, %v1748
  %v1765 = vmax.f32 %v1733, %v1749
  %v1766 = vmax.f32 %v1734, %v1750
  %v1767 = vmax.f32 %v1735, %v1751
  %v1768 = vmax.f32 %v1736, %v1752
  %v1769 = vld [vmem:[%s4] sm:$0xff]
  %v1770 = vld [vmem:[%s4 + $0x8] sm:$0xff]
  %v1771 = vld [vmem:[%s4 + $0x10] sm:$0xff]
  %v1772 = vld [vmem:[%s4 + $0x18] sm:$0xff]
  %vm1773 = vcmask 261120
  %v1775 = vsel %vm1773, %v1769, 0
  %v1778 = vsel %vm1773, %v1770, 0
  %v1781 = vsel %vm1773, %v1771, 0
  %v1784 = vsel %vm1773, %v1772, 0
  %1786 = vmatprep.subr.mxu0 %v1754
  %1787 = vmatpush1.msra.mxu0 %v1753
  %1788 = vmatprep.subr.mxu0 %v1758
  %1789 = vmatpush1.msra.mxu0 %v1757
  %1790 = vmatprep.subr.mxu0 %v1762
  %1791 = vmatpush1.msra.mxu0 %v1761
  %1792 = vmatprep.subr.mxu0 %v1766
  %1793 = vmatpush1.msra.mxu0 %v1765
  %1794 = vmatprep.subr.mxu0 0.0
  %1795 = vmatpush1.msra.mxu0 0.0
  %1796 = vmatprep.subr.mxu0 0.0
  %1797 = vmatpush1.msra.mxu0 0.0
  %1798 = vmatprep.subr.mxu0 0.0
  %1799 = vmatpush1.msra.mxu0 0.0
  %1800 = vmatprep.subr.mxu0 0.0
  %1801 = vmatpush1.msra.mxu0 0.0
  %1802 = vmatprep.subr.mxu0 0.0
  %1803 = vmatpush1.msra.mxu0 0.0
  %1804 = vmatprep.subr.mxu0 0.0
  %1805 = vmatpush1.msra.mxu0 0.0
  %1806 = vmatprep.subr.mxu0 0.0
  %1807 = vmatpush1.msra.mxu0 0.0
  %1808 = vmatprep.subr.mxu0 0.0
  %1809 = vmatpush1.msra.mxu0 0.0
  %1810 = vmatprep.subr.mxu0 0.0
  %1811 = vmatpush1.msra.mxu0 0.0
  %1812 = vmatprep.subr.mxu0 0.0
  %1813 = vmatpush1.msra.mxu0 0.0
  %1814 = vmatprep.subr.mxu0 0.0
  %1815 = vmatpush1.msra.mxu0 0.0
  %1816 = vmatprep.subr.mxu0 0.0
  %1817 = vmatpush1.msra.mxu0 0.0
  %1818 = vmatprep.subr.mxu0 0.0
  %1819 = vmatpush1.msra.mxu0 0.0
  %1820 = vmatprep.subr.mxu0 0.0
  %1821 = vmatpush1.msra.mxu0 0.0
  %1822 = vmatprep.subr.mxu0 0.0
  %1823 = vmatpush1.msra.mxu0 0.0
  %1824 = vmatprep.subr.mxu0 0.0
  %1825 = vmatpush1.msra.mxu0 0.0
  %1826 = vmatprep.subr.mxu0 0.0
  %1827 = vmatpush1.msra.mxu0 0.0
  %1828 = vmatprep.subr.mxu0 0.0
  %1829 = vmatpush1.msra.mxu0 0.0
  %1830 = vmatprep.subr.mxu0 0.0
  %1831 = vmatpush1.msra.mxu0 0.0
  %1832 = vmatprep.subr.mxu0 0.0
  %1833 = vmatpush1.msra.mxu0 0.0
  %1834 = vmatprep.subr.mxu0 0.0
  %1835 = vmatpush1.msra.mxu0 0.0
  %1836 = vmatprep.subr.mxu0 0.0
  %1837 = vmatpush1.msra.mxu0 0.0
  %1838 = vmatprep.subr.mxu0 0.0
  %1839 = vmatpush1.msra.mxu0 0.0
  %1840 = vmatprep.subr.mxu0 0.0
  %1841 = vmatpush1.msra.mxu0 0.0
  %1842 = vmatprep.subr.mxu0 0.0
  %1843 = vmatpush1.msra.mxu0 0.0
  %1844 = vmatprep.subr.mxu0 0.0
  %1845 = vmatpush1.msra.mxu0 0.0
  %1846 = vmatprep.subr.mxu0 0.0
  %1847 = vmatpush1.msra.mxu0 0.0
  %1848 = vmatprep.subr.mxu0 0.0
  %1849 = vmatpush1.msra.mxu0 0.0
  %1850 = vmatprep.mubr.f32.mxu0 0.0
  %1851 = vmatmul.mubr.f32.gmra.mrb[0].mxu0 %v1775
  %v1852 = vpop.f32.mrb[0].mxu0
  %v1853 = vadd.f32 %v51, %v1852
  %v1854 = vpop.f32.mrb[0].mxu0
  %v1855 = vadd.f32 %v52, %v1854
  %1856 = vmatprep.mubr.f32.mxu0 0.0
  %1857 = vmatmul.mubr.f32.gmra.mrb[0].mxu0 %v1778
  %v1858 = vpop.f32.mrb[0].mxu0
  %v1859 = vadd.f32 %v55, %v1858
  %v1860 = vpop.f32.mrb[0].mxu0
  %v1861 = vadd.f32 %v56, %v1860
  %1862 = vmatprep.mubr.f32.mxu0 0.0
  %1863 = vmatmul.mubr.f32.gmra.mrb[0].mxu0 %v1781
  %v1864 = vpop.f32.mrb[0].mxu0
  %v1865 = vadd.f32 %v59, %v1864
  %v1866 = vpop.f32.mrb[0].mxu0
  %v1867 = vadd.f32 %v60, %v1866
  %1868 = vmatprep.mubr.f32.mxu0 0.0
  %1869 = vmatmul.mubr.f32.gmra.mrb[0].mxu0 %v1784
  %v1870 = vpop.f32.mrb[0].mxu0
  %v1871 = vadd.f32 %v63, %v1870
  %v1872 = vpop.f32.mrb[0].mxu0
  %v1873 = vadd.f32 %v64, %v1872
  %1874 = vdwg.mxu0
  %1875 = vmatprep.subr.mxu0 %v1756
  %1876 = vmatpush1.msra.mxu0 %v1755
  %1877 = vmatprep.subr.mxu0 %v1760
  %1878 = vmatpush1.msra.mxu0 %v1759
  %1879 = vmatprep.subr.mxu0 %v1764
  %1880 = vmatpush1.msra.mxu0 %v1763
  %1881 = vmatprep.subr.mxu0 %v1768
  %1882 = vmatpush1.msra.mxu0 %v1767
  %1883 = vmatprep.subr.mxu0 0.0
  %1884 = vmatpush1.msra.mxu0 0.0
  %1885 = vmatprep.subr.mxu0 0.0
  %1886 = vmatpush1.msra.mxu0 0.0
  %1887 = vmatprep.subr.mxu0 0.0
  %1888 = vmatpush1.msra.mxu0 0.0
  %1889 = vmatprep.subr.mxu0 0.0
  %1890 = vmatpush1.msra.mxu0 0.0
  %1891 = vmatprep.subr.mxu0 0.0
  %1892 = vmatpush1.msra.mxu0 0.0
  %1893 = vmatprep.subr.mxu0 0.0
  %1894 = vmatpush1.msra.mxu0 0.0
  %1895 = vmatprep.subr.mxu0 0.0
  %1896 = vmatpush1.msra.mxu0 0.0
  %1897 = vmatprep.subr.mxu0 0.0
  %1898 = vmatpush1.msra.mxu0 0.0
  %1899 = vmatprep.subr.mxu0 0.0
  %1900 = vmatpush1.msra.mxu0 0.0
  %1901 = vmatprep.subr.mxu0 0.0
  %1902 = vmatpush1.msra.mxu0 0.0
  %1903 = vmatprep.subr.mxu0 0.0
  %1904 = vmatpush1.msra.mxu0 0.0
  %1905 = vmatprep.subr.mxu0 0.0
  %1906 = vmatpush1.msra.mxu0 0.0
  %1907 = vmatprep.subr.mxu0 0.0
  %1908 = vmatpush1.msra.mxu0 0.0
  %1909 = vmatprep.subr.mxu0 0.0
  %1910 = vmatpush1.msra.mxu0 0.0
  %1911 = vmatprep.subr.mxu0 0.0
  %1912 = vmatpush1.msra.mxu0 0.0
  %1913 = vmatprep.subr.mxu0 0.0
  %1914 = vmatpush1.msra.mxu0 0.0
  %1915 = vmatprep.subr.mxu0 0.0
  %1916 = vmatpush1.msra.mxu0 0.0
  %1917 = vmatprep.subr.mxu0 0.0
  %1918 = vmatpush1.msra.mxu0 0.0
  %1919 = vmatprep.subr.mxu0 0.0
  %1920 = vmatpush1.msra.mxu0 0.0
  %1921 = vmatprep.subr.mxu0 0.0
  %1922 = vmatpush1.msra.mxu0 0.0
  %1923 = vmatprep.subr.mxu0 0.0
  %1924 = vmatpush1.msra.mxu0 0.0
  %1925 = vmatprep.subr.mxu0 0.0
  %1926 = vmatpush1.msra.mxu0 0.0
  %1927 = vmatprep.subr.mxu0 0.0
  %1928 = vmatpush1.msra.mxu0 0.0
  %1929 = vmatprep.subr.mxu0 0.0
  %1930 = vmatpush1.msra.mxu0 0.0
  %1931 = vmatprep.subr.mxu0 0.0
  %1932 = vmatpush1.msra.mxu0 0.0
  %1933 = vmatprep.subr.mxu0 0.0
  %1934 = vmatpush1.msra.mxu0 0.0
  %1935 = vmatprep.subr.mxu0 0.0
  %1936 = vmatpush1.msra.mxu0 0.0
  %1937 = vmatprep.subr.mxu0 0.0
  %1938 = vmatpush1.msra.mxu0 0.0
  %1939 = vmatprep.mubr.f32.mxu0 0.0
  %1940 = vmatmul.mubr.f32.gmra.mrb[0].mxu0 %v1775
  %v1941 = vpop.f32.mrb[0].mxu0
  %v1942 = vadd.f32 %v53, %v1941
  %v1943 = vpop.f32.mrb[0].mxu0
  %v1944 = vadd.f32 %v54, %v1943
  %1945 = vmatprep.mubr.f32.mxu0 0.0
  %1946 = vmatmul.mubr.f32.gmra.mrb[0].mxu0 %v1778
  %v1947 = vpop.f32.mrb[0].mxu0
  %v1948 = vadd.f32 %v57, %v1947
  %v1949 = vpop.f32.mrb[0].mxu0
  %v1950 = vadd.f32 %v58, %v1949
  %1951 = vmatprep.mubr.f32.mxu0 0.0
  %1952 = vmatmul.mubr.f32.gmra.mrb[0].mxu0 %v1781
  %v1953 = vpop.f32.mrb[0].mxu0
  %v1954 = vadd.f32 %v61, %v1953
  %v1955 = vpop.f32.mrb[0].mxu0
  %v1956 = vadd.f32 %v62, %v1955
  %1957 = vmatprep.mubr.f32.mxu0 0.0
  %1958 = vmatmul.mubr.f32.gmra.mrb[0].mxu0 %v1784
  %v1959 = vpop.f32.mrb[0].mxu0
  %v1960 = vadd.f32 %v65, %v1959
  %v1961 = vpop.f32.mrb[0].mxu0
  %v1962 = vadd.f32 %v66, %v1961
  %1963 = vdwg.mxu0
  %1964 = vst [vmem:[%s6] sm:$0xff] %v1853
  %1965 = vst [vmem:[%s6 + $0x8] sm:$0xff] %v1855
  %1966 = vst [vmem:[%s6 + $0x10] sm:$0xff] %v1942
  %1967 = vst [vmem:[%s6 + $0x18] sm:$0xff] %v1944
  %1968 = vst [vmem:[%s6 + $0x20] sm:$0xff] %v1859
  %1969 = vst [vmem:[%s6 + $0x28] sm:$0xff] %v1861
  %1970 = vst [vmem:[%s6 + $0x30] sm:$0xff] %v1948
  %1971 = vst [vmem:[%s6 + $0x38] sm:$0xff] %v1950
  %1972 = vst [vmem:[%s6 + $0x40] sm:$0xff] %v1865
  %1973 = vst [vmem:[%s6 + $0x48] sm:$0xff] %v1867
  %1974 = vst [vmem:[%s6 + $0x50] sm:$0xff] %v1954
  %1975 = vst [vmem:[%s6 + $0x58] sm:$0xff] %v1956
  %1976 = vst [vmem:[%s6 + $0x60] sm:$0xff] %v1871
  %1977 = vst [vmem:[%s6 + $0x68] sm:$0xff] %v1873
  %1978 = vst [vmem:[%s6 + $0x70] sm:$0xff] %v1960
  %1979 = vst [vmem:[%s6 + $0x78] sm:$0xff] %v1962
  // Predicated region
  $region26: #{forward.1} parent=0 // pred_check
    _
  $region27: #{forward.1} parent=0 // pred_check_branch
    %1981 = sbr.rel (0) target = $region29
  $region28: #{forward.1} parent=0 // pred_region
    _
  $region29: #{forward.1} parent=0 // pred_fallthru
    _
  // Predicated region
  $region30: #{forward.1} parent=0 // pred_check
    _
  $region31: #{forward.1} parent=0 // pred_check_branch
    %1983 = sbr.rel (0) target = $region33
  $region32: #{forward.1} parent=0 // pred_region
    _
  $region33: #{forward.1} parent=0 // pred_fallthru
    _

</llo_original>
